<compile_context>
chip_gen: v7x
topology: tpu7x:2x2x1
jax: 0.10.0
libtpu: 0.0.40
codegen_flags: <defaults>
</compile_context>

<pallas_src>
import functools

import numpy as np

import jax
import jax.numpy as jnp
from jax.experimental import pallas as pl
from jax.experimental.pallas import tpu as pltpu


def _double_conv_kernel(x_ref, m_ref, w1_ref, s1_ref, b1_ref, w2_ref, s2_ref,
                        b2_ref, o_ref, *, H, W):
    """One batch element per grid step.

    x_ref  : (1, Cin, H*W)    bf16 input slab (channels on sublanes, pixels on lanes)
    m_ref  : (9, 1, H*W)      f32 per-tap border masks (1 inside, 0 where the
                              3x3 tap falls outside the image)
    w1_ref : (9, Cmid, Cin)   bf16 conv1 weights, tap-major (k = ky*3+kx)
    s1/b1  : (Cmid, 1)        f32 folded BN1 scale / bias
    w2_ref : (9, Cout, Cmid)  bf16 conv2 weights
    s2/b2  : (Cout, 1)        f32 folded BN2 scale / bias
    o_ref  : (1, Cout, H*W)   f32 output slab (lane-dense store)
    """
    HW = H * W
    pad = W + 1  # >= max |tap shift|

    def conv3x3(x2d, w_ref):
        # x2d: (C, HW) bf16 ; w_ref: (9, Cout, C)
        C = x2d.shape[0]
        Cout = w_ref.shape[1]
        z = jnp.zeros((C, pad), x2d.dtype)
        xp = jnp.concatenate([z, x2d, z], axis=1)          # (C, HW + 2*pad)
        acc = jnp.zeros((Cout, HW), jnp.float32)
        for ky in range(3):
            for kx in range(3):
                k = ky * 3 + kx
                s = (ky - 1) * W + (kx - 1)                 # flat tap shift
                patch = xp[:, pad + s: pad + s + HW]        # (C, HW) bf16
                contrib = jnp.dot(w_ref[k], patch,
                                  preferred_element_type=jnp.float32)
                if k != 4:  # center tap never crosses the border
                    contrib = contrib * m_ref[k]
                acc = acc + contrib
        return acc                                          # (Cout, HW) f32

    x2d = x_ref[0]                                          # (Cin, HW) bf16

    # conv1 + fused BN1 + ReLU (f32)
    acc1 = conv3x3(x2d, w1_ref)
    y1 = jnp.maximum(acc1 * s1_ref[...] + b1_ref[...], 0.0)

    # conv2 (bf16 matmul inputs) + fused BN2 + ReLU (f32)
    acc2 = conv3x3(y1.astype(x2d.dtype), w2_ref)
    y2 = jnp.maximum(acc2 * s2_ref[...] + b2_ref[...], 0.0)

    o_ref[0] = y2.astype(o_ref.dtype)                       # lane-dense store


def _tap_masks(H, W):
    """(9, 1, H*W) f32 masks: 1 where pixel (h+ky-1, w+kx-1) is inside the image."""
    h = np.arange(H)[:, None]
    w = np.arange(W)[None, :]
    masks = []
    for ky in range(3):
        for kx in range(3):
            valid = ((h + ky - 1 >= 0) & (h + ky - 1 < H) &
                     (w + kx - 1 >= 0) & (w + kx - 1 < W))
            masks.append(valid.astype(np.float32).reshape(1, H * W))
    return np.stack(masks, axis=0)


def double_conv_pallas(x_nchw, w1_oihw, gamma1, beta1, mean1, var1,
                       w2_oihw, gamma2, beta2, mean2, var2, eps=1e-5):
    """DoubleConv forward. x_nchw: (N, Cin, H, W) -> (N, Cout, H, W) float32."""
    N, Cin, H, W = x_nchw.shape
    Cmid = w1_oihw.shape[0]   # mid channels derived from conv1 (not assumed == Cout)
    Cout = w2_oihw.shape[0]
    HW = H * W

    cdt = jnp.bfloat16

    # NCHW kept; flatten spatial dims (free, layout-compatible reshape).
    x = x_nchw.reshape(N, Cin, HW).astype(cdt)

    # OIHW -> (tap, O, I) with tap = ky*3 + kx.
    w1 = jnp.transpose(w1_oihw, (2, 3, 0, 1)).reshape(9, Cmid, Cin).astype(cdt)
    w2 = jnp.transpose(w2_oihw, (2, 3, 0, 1)).reshape(9, Cout, Cmid).astype(cdt)

    # Fold inference BatchNorm into per-channel scale / bias (f32).
    inv1 = gamma1 / jnp.sqrt(var1 + eps)
    s1 = inv1.reshape(Cmid, 1).astype(jnp.float32)
    b1 = (beta1 - mean1 * inv1).reshape(Cmid, 1).astype(jnp.float32)
    inv2 = gamma2 / jnp.sqrt(var2 + eps)
    s2 = inv2.reshape(Cout, 1).astype(jnp.float32)
    b2 = (beta2 - mean2 * inv2).reshape(Cout, 1).astype(jnp.float32)

    masks = jnp.asarray(_tap_masks(H, W))                   # (9, 1, HW) f32

    kernel = functools.partial(_double_conv_kernel, H=H, W=W)

    out = pl.pallas_call(
        kernel,
        out_shape=jax.ShapeDtypeStruct((N, Cout, HW), jnp.float32),
        grid_spec=pltpu.PrefetchScalarGridSpec(
            num_scalar_prefetch=0,
            grid=(N,),
            in_specs=[
                pl.BlockSpec((1, Cin, HW), lambda n: (n, 0, 0)),
                pl.BlockSpec((9, 1, HW), lambda n: (0, 0, 0)),
                pl.BlockSpec((9, Cmid, Cin), lambda n: (0, 0, 0)),
                pl.BlockSpec((Cmid, 1), lambda n: (0, 0)),
                pl.BlockSpec((Cmid, 1), lambda n: (0, 0)),
                pl.BlockSpec((9, Cout, Cmid), lambda n: (0, 0, 0)),
                pl.BlockSpec((Cout, 1), lambda n: (0, 0)),
                pl.BlockSpec((Cout, 1), lambda n: (0, 0)),
            ],
            out_specs=pl.BlockSpec((1, Cout, HW), lambda n: (n, 0, 0)),
        ),
        compiler_params=pltpu.CompilerParams(
            dimension_semantics=("parallel",)),
    )(x, masks, w1, s1, b1, w2, s2, b2)

    # Free metadata reshape back to (N, Cout, H, W) -- still NCHW, no transpose.
    return out.reshape(N, Cout, H, W)


def _reference(x_nchw, w1_oihw, gamma1, beta1, mean1, var1,
               w2_oihw, gamma2, beta2, mean2, var2, eps=1e-5):
    """Plain-JAX reference (NCHW conv, inference BN, ReLU) matching the kernel's
    bf16-input / f32-accumulate numerics."""
    cast = lambda a: a.astype(jnp.bfloat16).astype(jnp.float32)

    def bn_relu(y, g, b, m, v):
        s = g / jnp.sqrt(v + eps)
        return jnp.maximum(y * s[None, :, None, None]
                           + (b - m * s)[None, :, None, None], 0.0)

    dn = ('NCHW', 'OIHW', 'NCHW')
    y = jax.lax.conv_general_dilated(cast(x_nchw), cast(w1_oihw), (1, 1), 'SAME',
                                     dimension_numbers=dn,
                                     precision=jax.lax.Precision.HIGHEST)
    y = bn_relu(y, gamma1, beta1, mean1, var1)
    y = jax.lax.conv_general_dilated(cast(y), cast(w2_oihw), (1, 1), 'SAME',
                                     dimension_numbers=dn,
                                     precision=jax.lax.Precision.HIGHEST)
    return bn_relu(y, gamma2, beta2, mean2, var2)


if __name__ == "__main__":
    key = jax.random.PRNGKey(0)
    N, Cin, Cout, H, W = 2, 4, 8, 16, 16

    ks = jax.random.split(key, 8)
    x = jax.random.normal(ks[0], (N, Cin, H, W), jnp.float32)

    # Deterministic synthetic parameters (PyTorch shapes: Conv2d OIHW, BN (C,)).
    w1 = 0.1 * jax.random.normal(ks[1], (Cout, Cin, 3, 3), jnp.float32)
    w2 = 0.1 * jax.random.normal(ks[2], (Cout, Cout, 3, 3), jnp.float32)
    gamma1 = 1.0 + 0.1 * jax.random.normal(ks[3], (Cout,), jnp.float32)
    beta1 = 0.1 * jax.random.normal(ks[4], (Cout,), jnp.float32)
    gamma2 = 1.0 + 0.1 * jax.random.normal(ks[5], (Cout,), jnp.float32)
    beta2 = 0.1 * jax.random.normal(ks[6], (Cout,), jnp.float32)
    mean1 = 0.05 * jax.random.normal(ks[7], (Cout,), jnp.float32)
    var1 = jnp.ones((Cout,), jnp.float32) * 0.9
    mean2 = jnp.zeros((Cout,), jnp.float32)
    var2 = jnp.ones((Cout,), jnp.float32) * 1.1

    out = double_conv_pallas(x, w1, gamma1, beta1, mean1, var1,
                             w2, gamma2, beta2, mean2, var2)
    out = jax.block_until_ready(out)

    ref = _reference(x, w1, gamma1, beta1, mean1, var1,
                     w2, gamma2, beta2, mean2, var2)
    assert out.shape == (N, Cout, H, W)
    max_err = float(jnp.max(jnp.abs(out - ref)))
    assert jnp.allclose(out, ref, rtol=2e-3, atol=2e-3), \
        f"mismatch vs reference (max abs err {max_err})"
    print("KERNEL_OK")
</pallas_src>

<mosaic_0001>
module attributes {stable_mosaic.version = 11 : i64} {
  func.func @_double_conv_kernel(%arg0: i32, %arg1: memref<1x4x256xbf16, #tpu.memory_space<vmem>>, %arg2: memref<9x1x256xf32, #tpu.memory_space<vmem>>, %arg3: memref<9x8x4xbf16, #tpu.memory_space<vmem>>, %arg4: memref<8x1xf32, #tpu.memory_space<vmem>>, %arg5: memref<8x1xf32, #tpu.memory_space<vmem>>, %arg6: memref<9x8x8xbf16, #tpu.memory_space<vmem>>, %arg7: memref<8x1xf32, #tpu.memory_space<vmem>>, %arg8: memref<8x1xf32, #tpu.memory_space<vmem>>, %arg9: memref<1x8x256xf32, #tpu.memory_space<vmem>>) attributes {dimension_semantics = [#tpu.dimension_semantics<parallel>], iteration_bounds = array<i64: 2>, scalar_prefetch = 0 : i64, scratch_operands = 0 : i64, tpu.core_type = #tpu.core_type<tc>, window_params = [{transform_indices = @transform_0, window_bounds = array<i64: 1, 4, 256>}, {pipeline_mode = #tpu.pipeline_mode<synchronous>, transform_indices = @transform_1, window_bounds = array<i64: 9, 1, 256>}, {pipeline_mode = #tpu.pipeline_mode<synchronous>, transform_indices = @transform_2, window_bounds = array<i64: 9, 8, 4>}, {pipeline_mode = #tpu.pipeline_mode<synchronous>, transform_indices = @transform_3, window_bounds = array<i64: 8, 1>}, {pipeline_mode = #tpu.pipeline_mode<synchronous>, transform_indices = @transform_4, window_bounds = array<i64: 8, 1>}, {pipeline_mode = #tpu.pipeline_mode<synchronous>, transform_indices = @transform_5, window_bounds = array<i64: 9, 8, 8>}, {pipeline_mode = #tpu.pipeline_mode<synchronous>, transform_indices = @transform_6, window_bounds = array<i64: 8, 1>}, {pipeline_mode = #tpu.pipeline_mode<synchronous>, transform_indices = @transform_7, window_bounds = array<i64: 8, 1>}, {transform_indices = @transform_8, window_bounds = array<i64: 1, 8, 256>}]} {
    %c0 = arith.constant 0 : index
    %c0_0 = arith.constant 0 : index
    %c0_1 = arith.constant 0 : index
    %0 = vector.load %arg1[%c0, %c0_0, %c0_1] : memref<1x4x256xbf16, #tpu.memory_space<vmem>>, vector<1x4x256xbf16>
    %1 = vector.shape_cast %0 : vector<1x4x256xbf16> to vector<4x256xbf16>
    %cst = arith.constant 0.000000e+00 : bf16
    %2 = vector.broadcast %cst : bf16 to vector<4x17xbf16>
    %3 = tpu.concatenate %2, %1, %2 in 1 : vector<4x17xbf16>, vector<4x256xbf16>, vector<4x17xbf16> -> vector<4x290xbf16>
    %cst_2 = arith.constant 0.000000e+00 : f32
    %4 = vector.broadcast %cst_2 : f32 to vector<8x256xf32>
    %5 = vector.extract_strided_slice %3 {offsets = [0, 0], sizes = [4, 256], strides = [1, 1]} : vector<4x290xbf16> to vector<4x256xbf16>
    %c0_3 = arith.constant 0 : index
    %c0_4 = arith.constant 0 : index
    %c0_5 = arith.constant 0 : index
    %6 = vector.load %arg3[%c0_3, %c0_4, %c0_5] : memref<9x8x4xbf16, #tpu.memory_space<vmem>>, vector<1x8x4xbf16>
    %7 = vector.shape_cast %6 : vector<1x8x4xbf16> to vector<8x4xbf16>
    %cst_6 = arith.constant dense<0.000000e+00> : vector<8x256xf32>
    %8 = tpu.matmul %7, %5, %cst_6 {dimension_numbers = #tpu.dot_dimension_numbers<[1], [0], [0], [1], [0, 0, 1, 1], [], []>} : vector<8x4xbf16>, vector<4x256xbf16>, vector<8x256xf32> -> vector<8x256xf32>
    %c0_7 = arith.constant 0 : index
    %c0_8 = arith.constant 0 : index
    %c0_9 = arith.constant 0 : index
    %9 = vector.load %arg2[%c0_7, %c0_8, %c0_9] : memref<9x1x256xf32, #tpu.memory_space<vmem>>, vector<1x1x256xf32>
    %10 = vector.shape_cast %9 : vector<1x1x256xf32> to vector<1x256xf32>
    %11 = vector.broadcast %10 : vector<1x256xf32> to vector<8x256xf32>
    %12 = arith.mulf %8, %11 : vector<8x256xf32>
    %13 = arith.addf %4, %12 : vector<8x256xf32>
    %14 = vector.extract_strided_slice %3 {offsets = [0, 1], sizes = [4, 256], strides = [1, 1]} : vector<4x290xbf16> to vector<4x256xbf16>
    %c1 = arith.constant 1 : index
    %c0_10 = arith.constant 0 : index
    %c0_11 = arith.constant 0 : index
    %15 = vector.load %arg3[%c1, %c0_10, %c0_11] : memref<9x8x4xbf16, #tpu.memory_space<vmem>>, vector<1x8x4xbf16>
    %16 = vector.shape_cast %15 : vector<1x8x4xbf16> to vector<8x4xbf16>
    %cst_12 = arith.constant dense<0.000000e+00> : vector<8x256xf32>
    %17 = tpu.matmul %16, %14, %cst_12 {dimension_numbers = #tpu.dot_dimension_numbers<[1], [0], [0], [1], [0, 0, 1, 1], [], []>} : vector<8x4xbf16>, vector<4x256xbf16>, vector<8x256xf32> -> vector<8x256xf32>
    %c1_13 = arith.constant 1 : index
    %c0_14 = arith.constant 0 : index
    %c0_15 = arith.constant 0 : index
    %18 = vector.load %arg2[%c1_13, %c0_14, %c0_15] : memref<9x1x256xf32, #tpu.memory_space<vmem>>, vector<1x1x256xf32>
    %19 = vector.shape_cast %18 : vector<1x1x256xf32> to vector<1x256xf32>
    %20 = vector.broadcast %19 : vector<1x256xf32> to vector<8x256xf32>
    %21 = arith.mulf %17, %20 : vector<8x256xf32>
    %22 = arith.addf %13, %21 : vector<8x256xf32>
    %23 = vector.extract_strided_slice %3 {offsets = [0, 2], sizes = [4, 256], strides = [1, 1]} : vector<4x290xbf16> to vector<4x256xbf16>
    %c2 = arith.constant 2 : index
    %c0_16 = arith.constant 0 : index
    %c0_17 = arith.constant 0 : index
    %24 = vector.load %arg3[%c2, %c0_16, %c0_17] : memref<9x8x4xbf16, #tpu.memory_space<vmem>>, vector<1x8x4xbf16>
    %25 = vector.shape_cast %24 : vector<1x8x4xbf16> to vector<8x4xbf16>
    %cst_18 = arith.constant dense<0.000000e+00> : vector<8x256xf32>
    %26 = tpu.matmul %25, %23, %cst_18 {dimension_numbers = #tpu.dot_dimension_numbers<[1], [0], [0], [1], [0, 0, 1, 1], [], []>} : vector<8x4xbf16>, vector<4x256xbf16>, vector<8x256xf32> -> vector<8x256xf32>
    %c2_19 = arith.constant 2 : index
    %c0_20 = arith.constant 0 : index
    %c0_21 = arith.constant 0 : index
    %27 = vector.load %arg2[%c2_19, %c0_20, %c0_21] : memref<9x1x256xf32, #tpu.memory_space<vmem>>, vector<1x1x256xf32>
    %28 = vector.shape_cast %27 : vector<1x1x256xf32> to vector<1x256xf32>
    %29 = vector.broadcast %28 : vector<1x256xf32> to vector<8x256xf32>
    %30 = arith.mulf %26, %29 : vector<8x256xf32>
    %31 = arith.addf %22, %30 : vector<8x256xf32>
    %32 = vector.extract_strided_slice %3 {offsets = [0, 16], sizes = [4, 256], strides = [1, 1]} : vector<4x290xbf16> to vector<4x256xbf16>
    %c3 = arith.constant 3 : index
    %c0_22 = arith.constant 0 : index
    %c0_23 = arith.constant 0 : index
    %33 = vector.load %arg3[%c3, %c0_22, %c0_23] : memref<9x8x4xbf16, #tpu.memory_space<vmem>>, vector<1x8x4xbf16>
    %34 = vector.shape_cast %33 : vector<1x8x4xbf16> to vector<8x4xbf16>
    %cst_24 = arith.constant dense<0.000000e+00> : vector<8x256xf32>
    %35 = tpu.matmul %34, %32, %cst_24 {dimension_numbers = #tpu.dot_dimension_numbers<[1], [0], [0], [1], [0, 0, 1, 1], [], []>} : vector<8x4xbf16>, vector<4x256xbf16>, vector<8x256xf32> -> vector<8x256xf32>
    %c3_25 = arith.constant 3 : index
    %c0_26 = arith.constant 0 : index
    %c0_27 = arith.constant 0 : index
    %36 = vector.load %arg2[%c3_25, %c0_26, %c0_27] : memref<9x1x256xf32, #tpu.memory_space<vmem>>, vector<1x1x256xf32>
    %37 = vector.shape_cast %36 : vector<1x1x256xf32> to vector<1x256xf32>
    %38 = vector.broadcast %37 : vector<1x256xf32> to vector<8x256xf32>
    %39 = arith.mulf %35, %38 : vector<8x256xf32>
    %40 = arith.addf %31, %39 : vector<8x256xf32>
    %41 = vector.extract_strided_slice %3 {offsets = [0, 17], sizes = [4, 256], strides = [1, 1]} : vector<4x290xbf16> to vector<4x256xbf16>
    %c4 = arith.constant 4 : index
    %c0_28 = arith.constant 0 : index
    %c0_29 = arith.constant 0 : index
    %42 = vector.load %arg3[%c4, %c0_28, %c0_29] : memref<9x8x4xbf16, #tpu.memory_space<vmem>>, vector<1x8x4xbf16>
    %43 = vector.shape_cast %42 : vector<1x8x4xbf16> to vector<8x4xbf16>
    %cst_30 = arith.constant dense<0.000000e+00> : vector<8x256xf32>
    %44 = tpu.matmul %43, %41, %cst_30 {dimension_numbers = #tpu.dot_dimension_numbers<[1], [0], [0], [1], [0, 0, 1, 1], [], []>} : vector<8x4xbf16>, vector<4x256xbf16>, vector<8x256xf32> -> vector<8x256xf32>
    %45 = arith.addf %40, %44 : vector<8x256xf32>
    %46 = vector.extract_strided_slice %3 {offsets = [0, 18], sizes = [4, 256], strides = [1, 1]} : vector<4x290xbf16> to vector<4x256xbf16>
    %c5 = arith.constant 5 : index
    %c0_31 = arith.constant 0 : index
    %c0_32 = arith.constant 0 : index
    %47 = vector.load %arg3[%c5, %c0_31, %c0_32] : memref<9x8x4xbf16, #tpu.memory_space<vmem>>, vector<1x8x4xbf16>
    %48 = vector.shape_cast %47 : vector<1x8x4xbf16> to vector<8x4xbf16>
    %cst_33 = arith.constant dense<0.000000e+00> : vector<8x256xf32>
    %49 = tpu.matmul %48, %46, %cst_33 {dimension_numbers = #tpu.dot_dimension_numbers<[1], [0], [0], [1], [0, 0, 1, 1], [], []>} : vector<8x4xbf16>, vector<4x256xbf16>, vector<8x256xf32> -> vector<8x256xf32>
    %c5_34 = arith.constant 5 : index
    %c0_35 = arith.constant 0 : index
    %c0_36 = arith.constant 0 : index
    %50 = vector.load %arg2[%c5_34, %c0_35, %c0_36] : memref<9x1x256xf32, #tpu.memory_space<vmem>>, vector<1x1x256xf32>
    %51 = vector.shape_cast %50 : vector<1x1x256xf32> to vector<1x256xf32>
    %52 = vector.broadcast %51 : vector<1x256xf32> to vector<8x256xf32>
    %53 = arith.mulf %49, %52 : vector<8x256xf32>
    %54 = arith.addf %45, %53 : vector<8x256xf32>
    %55 = vector.extract_strided_slice %3 {offsets = [0, 32], sizes = [4, 256], strides = [1, 1]} : vector<4x290xbf16> to vector<4x256xbf16>
    %c6 = arith.constant 6 : index
    %c0_37 = arith.constant 0 : index
    %c0_38 = arith.constant 0 : index
    %56 = vector.load %arg3[%c6, %c0_37, %c0_38] : memref<9x8x4xbf16, #tpu.memory_space<vmem>>, vector<1x8x4xbf16>
    %57 = vector.shape_cast %56 : vector<1x8x4xbf16> to vector<8x4xbf16>
    %cst_39 = arith.constant dense<0.000000e+00> : vector<8x256xf32>
    %58 = tpu.matmul %57, %55, %cst_39 {dimension_numbers = #tpu.dot_dimension_numbers<[1], [0], [0], [1], [0, 0, 1, 1], [], []>} : vector<8x4xbf16>, vector<4x256xbf16>, vector<8x256xf32> -> vector<8x256xf32>
    %c6_40 = arith.constant 6 : index
    %c0_41 = arith.constant 0 : index
    %c0_42 = arith.constant 0 : index
    %59 = vector.load %arg2[%c6_40, %c0_41, %c0_42] : memref<9x1x256xf32, #tpu.memory_space<vmem>>, vector<1x1x256xf32>
    %60 = vector.shape_cast %59 : vector<1x1x256xf32> to vector<1x256xf32>
    %61 = vector.broadcast %60 : vector<1x256xf32> to vector<8x256xf32>
    %62 = arith.mulf %58, %61 : vector<8x256xf32>
    %63 = arith.addf %54, %62 : vector<8x256xf32>
    %64 = vector.extract_strided_slice %3 {offsets = [0, 33], sizes = [4, 256], strides = [1, 1]} : vector<4x290xbf16> to vector<4x256xbf16>
    %c7 = arith.constant 7 : index
    %c0_43 = arith.constant 0 : index
    %c0_44 = arith.constant 0 : index
    %65 = vector.load %arg3[%c7, %c0_43, %c0_44] : memref<9x8x4xbf16, #tpu.memory_space<vmem>>, vector<1x8x4xbf16>
    %66 = vector.shape_cast %65 : vector<1x8x4xbf16> to vector<8x4xbf16>
    %cst_45 = arith.constant dense<0.000000e+00> : vector<8x256xf32>
    %67 = tpu.matmul %66, %64, %cst_45 {dimension_numbers = #tpu.dot_dimension_numbers<[1], [0], [0], [1], [0, 0, 1, 1], [], []>} : vector<8x4xbf16>, vector<4x256xbf16>, vector<8x256xf32> -> vector<8x256xf32>
    %c7_46 = arith.constant 7 : index
    %c0_47 = arith.constant 0 : index
    %c0_48 = arith.constant 0 : index
    %68 = vector.load %arg2[%c7_46, %c0_47, %c0_48] : memref<9x1x256xf32, #tpu.memory_space<vmem>>, vector<1x1x256xf32>
    %69 = vector.shape_cast %68 : vector<1x1x256xf32> to vector<1x256xf32>
    %70 = vector.broadcast %69 : vector<1x256xf32> to vector<8x256xf32>
    %71 = arith.mulf %67, %70 : vector<8x256xf32>
    %72 = arith.addf %63, %71 : vector<8x256xf32>
    %73 = vector.extract_strided_slice %3 {offsets = [0, 34], sizes = [4, 256], strides = [1, 1]} : vector<4x290xbf16> to vector<4x256xbf16>
    %c8 = arith.constant 8 : index
    %c0_49 = arith.constant 0 : index
    %c0_50 = arith.constant 0 : index
    %74 = vector.load %arg3[%c8, %c0_49, %c0_50] : memref<9x8x4xbf16, #tpu.memory_space<vmem>>, vector<1x8x4xbf16>
    %75 = vector.shape_cast %74 : vector<1x8x4xbf16> to vector<8x4xbf16>
    %cst_51 = arith.constant dense<0.000000e+00> : vector<8x256xf32>
    %76 = tpu.matmul %75, %73, %cst_51 {dimension_numbers = #tpu.dot_dimension_numbers<[1], [0], [0], [1], [0, 0, 1, 1], [], []>} : vector<8x4xbf16>, vector<4x256xbf16>, vector<8x256xf32> -> vector<8x256xf32>
    %c8_52 = arith.constant 8 : index
    %c0_53 = arith.constant 0 : index
    %c0_54 = arith.constant 0 : index
    %77 = vector.load %arg2[%c8_52, %c0_53, %c0_54] : memref<9x1x256xf32, #tpu.memory_space<vmem>>, vector<1x1x256xf32>
    %78 = vector.shape_cast %77 : vector<1x1x256xf32> to vector<1x256xf32>
    %79 = vector.broadcast %78 : vector<1x256xf32> to vector<8x256xf32>
    %80 = arith.mulf %76, %79 : vector<8x256xf32>
    %81 = arith.addf %72, %80 : vector<8x256xf32>
    %c0_55 = arith.constant 0 : index
    %c0_56 = arith.constant 0 : index
    %82 = vector.load %arg4[%c0_55, %c0_56] : memref<8x1xf32, #tpu.memory_space<vmem>>, vector<8x1xf32>
    %83 = vector.broadcast %82 : vector<8x1xf32> to vector<8x256xf32>
    %84 = arith.mulf %81, %83 : vector<8x256xf32>
    %c0_57 = arith.constant 0 : index
    %c0_58 = arith.constant 0 : index
    %85 = vector.load %arg5[%c0_57, %c0_58] : memref<8x1xf32, #tpu.memory_space<vmem>>, vector<8x1xf32>
    %86 = vector.broadcast %85 : vector<8x1xf32> to vector<8x256xf32>
    %87 = arith.addf %84, %86 : vector<8x256xf32>
    %cst_59 = arith.constant 0.000000e+00 : f32
    %88 = vector.broadcast %cst_59 : f32 to vector<8x256xf32>
    %89 = arith.maximumf %87, %88 : vector<8x256xf32>
    %90 = arith.truncf %89 : vector<8x256xf32> to vector<8x256xbf16>
    %cst_60 = arith.constant 0.000000e+00 : bf16
    %91 = vector.broadcast %cst_60 : bf16 to vector<8x17xbf16>
    %92 = tpu.concatenate %91, %90, %91 in 1 : vector<8x17xbf16>, vector<8x256xbf16>, vector<8x17xbf16> -> vector<8x290xbf16>
    %cst_61 = arith.constant 0.000000e+00 : f32
    %93 = vector.broadcast %cst_61 : f32 to vector<8x256xf32>
    %94 = vector.extract_strided_slice %92 {offsets = [0, 0], sizes = [8, 256], strides = [1, 1]} : vector<8x290xbf16> to vector<8x256xbf16>
    %c0_62 = arith.constant 0 : index
    %c0_63 = arith.constant 0 : index
    %c0_64 = arith.constant 0 : index
    %95 = vector.load %arg6[%c0_62, %c0_63, %c0_64] : memref<9x8x8xbf16, #tpu.memory_space<vmem>>, vector<1x8x8xbf16>
    %96 = vector.shape_cast %95 : vector<1x8x8xbf16> to vector<8x8xbf16>
    %cst_65 = arith.constant dense<0.000000e+00> : vector<8x256xf32>
    %97 = tpu.matmul %96, %94, %cst_65 {dimension_numbers = #tpu.dot_dimension_numbers<[1], [0], [0], [1], [0, 0, 1, 1], [], []>} : vector<8x8xbf16>, vector<8x256xbf16>, vector<8x256xf32> -> vector<8x256xf32>
    %c0_66 = arith.constant 0 : index
    %c0_67 = arith.constant 0 : index
    %c0_68 = arith.constant 0 : index
    %98 = vector.load %arg2[%c0_66, %c0_67, %c0_68] : memref<9x1x256xf32, #tpu.memory_space<vmem>>, vector<1x1x256xf32>
    %99 = vector.shape_cast %98 : vector<1x1x256xf32> to vector<1x256xf32>
    %100 = vector.broadcast %99 : vector<1x256xf32> to vector<8x256xf32>
    %101 = arith.mulf %97, %100 : vector<8x256xf32>
    %102 = arith.addf %93, %101 : vector<8x256xf32>
    %103 = vector.extract_strided_slice %92 {offsets = [0, 1], sizes = [8, 256], strides = [1, 1]} : vector<8x290xbf16> to vector<8x256xbf16>
    %c1_69 = arith.constant 1 : index
    %c0_70 = arith.constant 0 : index
    %c0_71 = arith.constant 0 : index
    %104 = vector.load %arg6[%c1_69, %c0_70, %c0_71] : memref<9x8x8xbf16, #tpu.memory_space<vmem>>, vector<1x8x8xbf16>
    %105 = vector.shape_cast %104 : vector<1x8x8xbf16> to vector<8x8xbf16>
    %cst_72 = arith.constant dense<0.000000e+00> : vector<8x256xf32>
    %106 = tpu.matmul %105, %103, %cst_72 {dimension_numbers = #tpu.dot_dimension_numbers<[1], [0], [0], [1], [0, 0, 1, 1], [], []>} : vector<8x8xbf16>, vector<8x256xbf16>, vector<8x256xf32> -> vector<8x256xf32>
    %c1_73 = arith.constant 1 : index
    %c0_74 = arith.constant 0 : index
    %c0_75 = arith.constant 0 : index
    %107 = vector.load %arg2[%c1_73, %c0_74, %c0_75] : memref<9x1x256xf32, #tpu.memory_space<vmem>>, vector<1x1x256xf32>
    %108 = vector.shape_cast %107 : vector<1x1x256xf32> to vector<1x256xf32>
    %109 = vector.broadcast %108 : vector<1x256xf32> to vector<8x256xf32>
    %110 = arith.mulf %106, %109 : vector<8x256xf32>
    %111 = arith.addf %102, %110 : vector<8x256xf32>
    %112 = vector.extract_strided_slice %92 {offsets = [0, 2], sizes = [8, 256], strides = [1, 1]} : vector<8x290xbf16> to vector<8x256xbf16>
    %c2_76 = arith.constant 2 : index
    %c0_77 = arith.constant 0 : index
    %c0_78 = arith.constant 0 : index
    %113 = vector.load %arg6[%c2_76, %c0_77, %c0_78] : memref<9x8x8xbf16, #tpu.memory_space<vmem>>, vector<1x8x8xbf16>
    %114 = vector.shape_cast %113 : vector<1x8x8xbf16> to vector<8x8xbf16>
    %cst_79 = arith.constant dense<0.000000e+00> : vector<8x256xf32>
    %115 = tpu.matmul %114, %112, %cst_79 {dimension_numbers = #tpu.dot_dimension_numbers<[1], [0], [0], [1], [0, 0, 1, 1], [], []>} : vector<8x8xbf16>, vector<8x256xbf16>, vector<8x256xf32> -> vector<8x256xf32>
    %c2_80 = arith.constant 2 : index
    %c0_81 = arith.constant 0 : index
    %c0_82 = arith.constant 0 : index
    %116 = vector.load %arg2[%c2_80, %c0_81, %c0_82] : memref<9x1x256xf32, #tpu.memory_space<vmem>>, vector<1x1x256xf32>
    %117 = vector.shape_cast %116 : vector<1x1x256xf32> to vector<1x256xf32>
    %118 = vector.broadcast %117 : vector<1x256xf32> to vector<8x256xf32>
    %119 = arith.mulf %115, %118 : vector<8x256xf32>
    %120 = arith.addf %111, %119 : vector<8x256xf32>
    %121 = vector.extract_strided_slice %92 {offsets = [0, 16], sizes = [8, 256], strides = [1, 1]} : vector<8x290xbf16> to vector<8x256xbf16>
    %c3_83 = arith.constant 3 : index
    %c0_84 = arith.constant 0 : index
    %c0_85 = arith.constant 0 : index
    %122 = vector.load %arg6[%c3_83, %c0_84, %c0_85] : memref<9x8x8xbf16, #tpu.memory_space<vmem>>, vector<1x8x8xbf16>
    %123 = vector.shape_cast %122 : vector<1x8x8xbf16> to vector<8x8xbf16>
    %cst_86 = arith.constant dense<0.000000e+00> : vector<8x256xf32>
    %124 = tpu.matmul %123, %121, %cst_86 {dimension_numbers = #tpu.dot_dimension_numbers<[1], [0], [0], [1], [0, 0, 1, 1], [], []>} : vector<8x8xbf16>, vector<8x256xbf16>, vector<8x256xf32> -> vector<8x256xf32>
    %c3_87 = arith.constant 3 : index
    %c0_88 = arith.constant 0 : index
    %c0_89 = arith.constant 0 : index
    %125 = vector.load %arg2[%c3_87, %c0_88, %c0_89] : memref<9x1x256xf32, #tpu.memory_space<vmem>>, vector<1x1x256xf32>
    %126 = vector.shape_cast %125 : vector<1x1x256xf32> to vector<1x256xf32>
    %127 = vector.broadcast %126 : vector<1x256xf32> to vector<8x256xf32>
    %128 = arith.mulf %124, %127 : vector<8x256xf32>
    %129 = arith.addf %120, %128 : vector<8x256xf32>
    %130 = vector.extract_strided_slice %92 {offsets = [0, 17], sizes = [8, 256], strides = [1, 1]} : vector<8x290xbf16> to vector<8x256xbf16>
    %c4_90 = arith.constant 4 : index
    %c0_91 = arith.constant 0 : index
    %c0_92 = arith.constant 0 : index
    %131 = vector.load %arg6[%c4_90, %c0_91, %c0_92] : memref<9x8x8xbf16, #tpu.memory_space<vmem>>, vector<1x8x8xbf16>
    %132 = vector.shape_cast %131 : vector<1x8x8xbf16> to vector<8x8xbf16>
    %cst_93 = arith.constant dense<0.000000e+00> : vector<8x256xf32>
    %133 = tpu.matmul %132, %130, %cst_93 {dimension_numbers = #tpu.dot_dimension_numbers<[1], [0], [0], [1], [0, 0, 1, 1], [], []>} : vector<8x8xbf16>, vector<8x256xbf16>, vector<8x256xf32> -> vector<8x256xf32>
    %134 = arith.addf %129, %133 : vector<8x256xf32>
    %135 = vector.extract_strided_slice %92 {offsets = [0, 18], sizes = [8, 256], strides = [1, 1]} : vector<8x290xbf16> to vector<8x256xbf16>
    %c5_94 = arith.constant 5 : index
    %c0_95 = arith.constant 0 : index
    %c0_96 = arith.constant 0 : index
    %136 = vector.load %arg6[%c5_94, %c0_95, %c0_96] : memref<9x8x8xbf16, #tpu.memory_space<vmem>>, vector<1x8x8xbf16>
    %137 = vector.shape_cast %136 : vector<1x8x8xbf16> to vector<8x8xbf16>
    %cst_97 = arith.constant dense<0.000000e+00> : vector<8x256xf32>
    %138 = tpu.matmul %137, %135, %cst_97 {dimension_numbers = #tpu.dot_dimension_numbers<[1], [0], [0], [1], [0, 0, 1, 1], [], []>} : vector<8x8xbf16>, vector<8x256xbf16>, vector<8x256xf32> -> vector<8x256xf32>
    %c5_98 = arith.constant 5 : index
    %c0_99 = arith.constant 0 : index
    %c0_100 = arith.constant 0 : index
    %139 = vector.load %arg2[%c5_98, %c0_99, %c0_100] : memref<9x1x256xf32, #tpu.memory_space<vmem>>, vector<1x1x256xf32>
    %140 = vector.shape_cast %139 : vector<1x1x256xf32> to vector<1x256xf32>
    %141 = vector.broadcast %140 : vector<1x256xf32> to vector<8x256xf32>
    %142 = arith.mulf %138, %141 : vector<8x256xf32>
    %143 = arith.addf %134, %142 : vector<8x256xf32>
    %144 = vector.extract_strided_slice %92 {offsets = [0, 32], sizes = [8, 256], strides = [1, 1]} : vector<8x290xbf16> to vector<8x256xbf16>
    %c6_101 = arith.constant 6 : index
    %c0_102 = arith.constant 0 : index
    %c0_103 = arith.constant 0 : index
    %145 = vector.load %arg6[%c6_101, %c0_102, %c0_103] : memref<9x8x8xbf16, #tpu.memory_space<vmem>>, vector<1x8x8xbf16>
    %146 = vector.shape_cast %145 : vector<1x8x8xbf16> to vector<8x8xbf16>
    %cst_104 = arith.constant dense<0.000000e+00> : vector<8x256xf32>
    %147 = tpu.matmul %146, %144, %cst_104 {dimension_numbers = #tpu.dot_dimension_numbers<[1], [0], [0], [1], [0, 0, 1, 1], [], []>} : vector<8x8xbf16>, vector<8x256xbf16>, vector<8x256xf32> -> vector<8x256xf32>
    %c6_105 = arith.constant 6 : index
    %c0_106 = arith.constant 0 : index
    %c0_107 = arith.constant 0 : index
    %148 = vector.load %arg2[%c6_105, %c0_106, %c0_107] : memref<9x1x256xf32, #tpu.memory_space<vmem>>, vector<1x1x256xf32>
    %149 = vector.shape_cast %148 : vector<1x1x256xf32> to vector<1x256xf32>
    %150 = vector.broadcast %149 : vector<1x256xf32> to vector<8x256xf32>
    %151 = arith.mulf %147, %150 : vector<8x256xf32>
    %152 = arith.addf %143, %151 : vector<8x256xf32>
    %153 = vector.extract_strided_slice %92 {offsets = [0, 33], sizes = [8, 256], strides = [1, 1]} : vector<8x290xbf16> to vector<8x256xbf16>
    %c7_108 = arith.constant 7 : index
    %c0_109 = arith.constant 0 : index
    %c0_110 = arith.constant 0 : index
    %154 = vector.load %arg6[%c7_108, %c0_109, %c0_110] : memref<9x8x8xbf16, #tpu.memory_space<vmem>>, vector<1x8x8xbf16>
    %155 = vector.shape_cast %154 : vector<1x8x8xbf16> to vector<8x8xbf16>
    %cst_111 = arith.constant dense<0.000000e+00> : vector<8x256xf32>
    %156 = tpu.matmul %155, %153, %cst_111 {dimension_numbers = #tpu.dot_dimension_numbers<[1], [0], [0], [1], [0, 0, 1, 1], [], []>} : vector<8x8xbf16>, vector<8x256xbf16>, vector<8x256xf32> -> vector<8x256xf32>
    %c7_112 = arith.constant 7 : index
    %c0_113 = arith.constant 0 : index
    %c0_114 = arith.constant 0 : index
    %157 = vector.load %arg2[%c7_112, %c0_113, %c0_114] : memref<9x1x256xf32, #tpu.memory_space<vmem>>, vector<1x1x256xf32>
    %158 = vector.shape_cast %157 : vector<1x1x256xf32> to vector<1x256xf32>
    %159 = vector.broadcast %158 : vector<1x256xf32> to vector<8x256xf32>
    %160 = arith.mulf %156, %159 : vector<8x256xf32>
    %161 = arith.addf %152, %160 : vector<8x256xf32>
    %162 = vector.extract_strided_slice %92 {offsets = [0, 34], sizes = [8, 256], strides = [1, 1]} : vector<8x290xbf16> to vector<8x256xbf16>
    %c8_115 = arith.constant 8 : index
    %c0_116 = arith.constant 0 : index
    %c0_117 = arith.constant 0 : index
    %163 = vector.load %arg6[%c8_115, %c0_116, %c0_117] : memref<9x8x8xbf16, #tpu.memory_space<vmem>>, vector<1x8x8xbf16>
    %164 = vector.shape_cast %163 : vector<1x8x8xbf16> to vector<8x8xbf16>
    %cst_118 = arith.constant dense<0.000000e+00> : vector<8x256xf32>
    %165 = tpu.matmul %164, %162, %cst_118 {dimension_numbers = #tpu.dot_dimension_numbers<[1], [0], [0], [1], [0, 0, 1, 1], [], []>} : vector<8x8xbf16>, vector<8x256xbf16>, vector<8x256xf32> -> vector<8x256xf32>
    %c8_119 = arith.constant 8 : index
    %c0_120 = arith.constant 0 : index
    %c0_121 = arith.constant 0 : index
    %166 = vector.load %arg2[%c8_119, %c0_120, %c0_121] : memref<9x1x256xf32, #tpu.memory_space<vmem>>, vector<1x1x256xf32>
    %167 = vector.shape_cast %166 : vector<1x1x256xf32> to vector<1x256xf32>
    %168 = vector.broadcast %167 : vector<1x256xf32> to vector<8x256xf32>
    %169 = arith.mulf %165, %168 : vector<8x256xf32>
    %170 = arith.addf %161, %169 : vector<8x256xf32>
    %c0_122 = arith.constant 0 : index
    %c0_123 = arith.constant 0 : index
    %171 = vector.load %arg7[%c0_122, %c0_123] : memref<8x1xf32, #tpu.memory_space<vmem>>, vector<8x1xf32>
    %172 = vector.broadcast %171 : vector<8x1xf32> to vector<8x256xf32>
    %173 = arith.mulf %170, %172 : vector<8x256xf32>
    %c0_124 = arith.constant 0 : index
    %c0_125 = arith.constant 0 : index
    %174 = vector.load %arg8[%c0_124, %c0_125] : memref<8x1xf32, #tpu.memory_space<vmem>>, vector<8x1xf32>
    %175 = vector.broadcast %174 : vector<8x1xf32> to vector<8x256xf32>
    %176 = arith.addf %173, %175 : vector<8x256xf32>
    %cst_126 = arith.constant 0.000000e+00 : f32
    %177 = vector.broadcast %cst_126 : f32 to vector<8x256xf32>
    %178 = arith.maximumf %176, %177 : vector<8x256xf32>
    %c0_127 = arith.constant 0 : index
    %c0_128 = arith.constant 0 : index
    %c0_129 = arith.constant 0 : index
    %179 = vector.load %arg9[%c0_127, %c0_128, %c0_129] : memref<1x8x256xf32, #tpu.memory_space<vmem>>, vector<1x8x256xf32>
    %180 = vector.shape_cast %179 : vector<1x8x256xf32> to vector<8x256xf32>
    %181 = vector.shape_cast %178 : vector<8x256xf32> to vector<1x8x256xf32>
    tpu.vector_store %arg9[%c0_127, %c0_128, %c0_129], %181 {strides = array<i32>} : memref<1x8x256xf32, #tpu.memory_space<vmem>>, vector<1x8x256xf32>,
    return
  }
  func.func @transform_0(%arg0: i32) -> (i32, i32, i32) {
    %c0_i32 = arith.constant 0 : i32
    %c0_i32_0 = arith.constant 0 : i32
    %c0_i32_1 = arith.constant 0 : i32
    return %arg0, %c0_i32, %c0_i32_0 : i32, i32, i32
  }
  func.func @transform_1(%arg0: i32) -> (i32, i32, i32) {
    %c0_i32 = arith.constant 0 : i32
    %c0_i32_0 = arith.constant 0 : i32
    %c0_i32_1 = arith.constant 0 : i32
    %c0_i32_2 = arith.constant 0 : i32
    return %c0_i32, %c0_i32_0, %c0_i32_1 : i32, i32, i32
  }
  func.func @transform_2(%arg0: i32) -> (i32, i32, i32) {
    %c0_i32 = arith.constant 0 : i32
    %c0_i32_0 = arith.constant 0 : i32
    %c0_i32_1 = arith.constant 0 : i32
    %c0_i32_2 = arith.constant 0 : i32
    return %c0_i32, %c0_i32_0, %c0_i32_1 : i32, i32, i32
  }
  func.func @transform_3(%arg0: i32) -> (i32, i32) {
    %c0_i32 = arith.constant 0 : i32
    %c0_i32_0 = arith.constant 0 : i32
    %c0_i32_1 = arith.constant 0 : i32
    return %c0_i32, %c0_i32_0 : i32, i32
  }
  func.func @transform_4(%arg0: i32) -> (i32, i32) {
    %c0_i32 = arith.constant 0 : i32
    %c0_i32_0 = arith.constant 0 : i32
    %c0_i32_1 = arith.constant 0 : i32
    return %c0_i32, %c0_i32_0 : i32, i32
  }
  func.func @transform_5(%arg0: i32) -> (i32, i32, i32) {
    %c0_i32 = arith.constant 0 : i32
    %c0_i32_0 = arith.constant 0 : i32
    %c0_i32_1 = arith.constant 0 : i32
    %c0_i32_2 = arith.constant 0 : i32
    return %c0_i32, %c0_i32_0, %c0_i32_1 : i32, i32, i32
  }
  func.func @transform_6(%arg0: i32) -> (i32, i32) {
    %c0_i32 = arith.constant 0 : i32
    %c0_i32_0 = arith.constant 0 : i32
    %c0_i32_1 = arith.constant 0 : i32
    return %c0_i32, %c0_i32_0 : i32, i32
  }
  func.func @transform_7(%arg0: i32) -> (i32, i32) {
    %c0_i32 = arith.constant 0 : i32
    %c0_i32_0 = arith.constant 0 : i32
    %c0_i32_1 = arith.constant 0 : i32
    return %c0_i32, %c0_i32_0 : i32, i32
  }
  func.func @transform_8(%arg0: i32) -> (i32, i32, i32) {
    %c0_i32 = arith.constant 0 : i32
    %c0_i32_0 = arith.constant 0 : i32
    %c0_i32_1 = arith.constant 0 : i32
    return %arg0, %c0_i32, %c0_i32_0 : i32, i32, i32
  }
}

</mosaic_0001>

<llo_original>
// kernel: tpu_custom_call.1
$region0: #{tpu_custom_call.1}
  #allocation0 [shape = 'u32[]', space=smem, size = 0x4, offset = 0x4, fixed_abs, tag = 'smem constant byte address 0x4 - core index']
  #allocation1 [shape = 'u32[144,128]{1,0:T(1,128)}', space=vmem, size = 0x12000, scoped, tag = 'internal scratch']
  %s0 = inlined_call_operand.vmem [shape: bf16[2,4,256], index: 0, kind: input, shape index: {}]
  %s1 = inlined_call_operand.vmem [shape: f32[9,1,256], index: 1, kind: input, shape index: {}]
  %s2 = inlined_call_operand.vmem [shape: bf16[9,8,4], index: 2, kind: input, shape index: {}]
  %s3 = inlined_call_operand.vmem [shape: f32[8,1], index: 3, kind: input, shape index: {}]
  %s4 = inlined_call_operand.vmem [shape: f32[8,1], index: 4, kind: input, shape index: {}]
  %s5 = inlined_call_operand.vmem [shape: bf16[9,8,8], index: 5, kind: input, shape index: {}]
  %s6 = inlined_call_operand.vmem [shape: f32[8,1], index: 6, kind: input, shape index: {}]
  %s7 = inlined_call_operand.vmem [shape: f32[8,1], index: 7, kind: input, shape index: {}]
  %s8 = inlined_call_operand.hbm [shape: f32[2,8,256], index: 8, kind: output, shape index: {}]
  %s9 = sld [smem:[#allocation0]]
  $region65: #{tpu_custom_call.1} parent=0
    _
  %s11 = ssub.s32 1, %s9
  %s12 = scalar_select 0, %s11, %s9
  $region1: #{tpu_custom_call.1} parent=0
    #allocation2 [shape = 'u8[16384]{0}', space=vmem, size = 0x4000, scoped, tag = 'output window, operand 0']
    #allocation3 [shape = 's32[2]{0}', space=sflag, size = 0x8, scoped, tag = 'scoped memory for tpu_custom_call.1']
    %13 = vsyncpa [#allocation3], 0
    %s14 = scalar_lea.sflag [#allocation3], 1
    %15 = vsyncpa %s14, 0
    loop: start=0, step=1, limit=4
    $region2: #{tpu_custom_call.1} parent=1 // loop_pre_header
      _
    $region3: #{tpu_custom_call.1} parent=1 // loop_header
      %s17 = sphi 0, %s21
      %p18 = scmp.ge.s32.totalorder %s17, 4
      %s27 = sphi 0, %s29
      %s30 = sphi 0, %s27
      %s31 = sphi 0, %s30
      %s47 = sphi 0, %s31
      %s51 = sphi 0, %s51
      %s53 = sphi 0, %s51
      %s54 = sphi 0, %s53
      %s68 = sphi 0, %s54
      %s72 = sphi 0, %s72
      %s74 = sphi 0, %s72
      %s75 = sphi 0, %s74
      %s89 = sphi 0, %s75
      %s93 = sphi 0, %s93
      %s95 = sphi 0, %s93
      %s96 = sphi 0, %s95
      %s110 = sphi 0, %s96
      %s114 = sphi 0, %s114
      %s116 = sphi 0, %s114
      %s117 = sphi 0, %s116
      %s131 = sphi 0, %s117
      %s135 = sphi 0, %s135
      %s137 = sphi 0, %s135
      %s138 = sphi 0, %s137
      %s152 = sphi 0, %s138
      %s156 = sphi 0, %s156
      %s158 = sphi 0, %s156
      %s159 = sphi 0, %s158
      %s173 = sphi 0, %s159
      %s177 = sphi 0, %s177
      %s179 = sphi 0, %s177
      %s180 = sphi 0, %s179
      %s194 = sphi 0, %s180
      %s200 = sphi 0, %s202
      %s203 = sphi 0, %s200
      %s204 = sphi 0, %s203
      %s220 = sphi 0, %s204
    $region4: #{tpu_custom_call.1} parent=1 // loop_header_branch
      %20 = sbr.rel (%p18) target = $region8
    $region5: #{tpu_custom_call.1} parent=1 // loop_body
      %s22 = ssub.s32 %s17, 1
      %s23 = ssub.s32 %s17, 2
      %s24 = sadd.s32 %s17, 1
      %s25 = ssub.s32 %s17, %s24
      %p26 = scmp.eq.s32.totalorder %s25, 0
      %s28 = sadd.s32 %s27, 1
      %s29 = scalar_select %p26, %s27, %s28
      %p32 = pneg %p26
      %p33 = scmp.eq.s32.totalorder %s17, 1
      %p34 = por %p32, %p33
      %p35 = scmp.ne.s32.totalorder %s27, %s30
      %p36 = scmp.eq.s32.totalorder %s17, 0
      %p37 = por %p35, %p36
      %p38 = scmp.ne.s32.totalorder %s27, %s30
      %p39 = scmp.eq.s32.totalorder %s22, 1
      %p40 = por %p38, %p39
      %p41 = scmp.ne.s32.totalorder %s30, %s31
      %p42 = scmp.eq.s32.totalorder %s22, 0
      %p43 = por %p41, %p42
      %p44 = scmp.ne.s32.totalorder %s30, %s31
      %p45 = scmp.eq.s32.totalorder %s23, 1
      %p46 = por %p44, %p45
      %p48 = scmp.ne.s32.totalorder %s31, %s47
      %p49 = scmp.eq.s32.totalorder %s23, 0
      %p50 = por %p48, %p49
      %s52 = sadd.s32 %s51, 1
      %p55 = scmp.eq.s32.totalorder %s17, 1
      %p56 = scmp.ne.s32.totalorder %s51, %s53
      %p57 = scmp.eq.s32.totalorder %s17, 0
      %p58 = por %p56, %p57
      %p59 = scmp.ne.s32.totalorder %s51, %s53
      %p60 = scmp.eq.s32.totalorder %s22, 1
      %p61 = por %p59, %p60
      %p62 = scmp.ne.s32.totalorder %s53, %s54
      %p63 = scmp.eq.s32.totalorder %s22, 0
      %p64 = por %p62, %p63
      %p65 = scmp.ne.s32.totalorder %s53, %s54
      %p66 = scmp.eq.s32.totalorder %s23, 1
      %p67 = por %p65, %p66
      %p69 = scmp.ne.s32.totalorder %s54, %s68
      %p70 = scmp.eq.s32.totalorder %s23, 0
      %p71 = por %p69, %p70
      %s73 = sadd.s32 %s72, 1
      %p76 = scmp.eq.s32.totalorder %s17, 1
      %p77 = scmp.ne.s32.totalorder %s72, %s74
      %p78 = scmp.eq.s32.totalorder %s17, 0
      %p79 = por %p77, %p78
      %p80 = scmp.ne.s32.totalorder %s72, %s74
      %p81 = scmp.eq.s32.totalorder %s22, 1
      %p82 = por %p80, %p81
      %p83 = scmp.ne.s32.totalorder %s74, %s75
      %p84 = scmp.eq.s32.totalorder %s22, 0
      %p85 = por %p83, %p84
      %p86 = scmp.ne.s32.totalorder %s74, %s75
      %p87 = scmp.eq.s32.totalorder %s23, 1
      %p88 = por %p86, %p87
      %p90 = scmp.ne.s32.totalorder %s75, %s89
      %p91 = scmp.eq.s32.totalorder %s23, 0
      %p92 = por %p90, %p91
      %s94 = sadd.s32 %s93, 1
      %p97 = scmp.eq.s32.totalorder %s17, 1
      %p98 = scmp.ne.s32.totalorder %s93, %s95
      %p99 = scmp.eq.s32.totalorder %s17, 0
      %p100 = por %p98, %p99
      %p101 = scmp.ne.s32.totalorder %s93, %s95
      %p102 = scmp.eq.s32.totalorder %s22, 1
      %p103 = por %p101, %p102
      %p104 = scmp.ne.s32.totalorder %s95, %s96
      %p105 = scmp.eq.s32.totalorder %s22, 0
      %p106 = por %p104, %p105
      %p107 = scmp.ne.s32.totalorder %s95, %s96
      %p108 = scmp.eq.s32.totalorder %s23, 1
      %p109 = por %p107, %p108
      %p111 = scmp.ne.s32.totalorder %s96, %s110
      %p112 = scmp.eq.s32.totalorder %s23, 0
      %p113 = por %p111, %p112
      %s115 = sadd.s32 %s114, 1
      %p118 = scmp.eq.s32.totalorder %s17, 1
      %p119 = scmp.ne.s32.totalorder %s114, %s116
      %p120 = scmp.eq.s32.totalorder %s17, 0
      %p121 = por %p119, %p120
      %p122 = scmp.ne.s32.totalorder %s114, %s116
      %p123 = scmp.eq.s32.totalorder %s22, 1
      %p124 = por %p122, %p123
      %p125 = scmp.ne.s32.totalorder %s116, %s117
      %p126 = scmp.eq.s32.totalorder %s22, 0
      %p127 = por %p125, %p126
      %p128 = scmp.ne.s32.totalorder %s116, %s117
      %p129 = scmp.eq.s32.totalorder %s23, 1
      %p130 = por %p128, %p129
      %p132 = scmp.ne.s32.totalorder %s117, %s131
      %p133 = scmp.eq.s32.totalorder %s23, 0
      %p134 = por %p132, %p133
      %s136 = sadd.s32 %s135, 1
      %p139 = scmp.eq.s32.totalorder %s17, 1
      %p140 = scmp.ne.s32.totalorder %s135, %s137
      %p141 = scmp.eq.s32.totalorder %s17, 0
      %p142 = por %p140, %p141
      %p143 = scmp.ne.s32.totalorder %s135, %s137
      %p144 = scmp.eq.s32.totalorder %s22, 1
      %p145 = por %p143, %p144
      %p146 = scmp.ne.s32.totalorder %s137, %s138
      %p147 = scmp.eq.s32.totalorder %s22, 0
      %p148 = por %p146, %p147
      %p149 = scmp.ne.s32.totalorder %s137, %s138
      %p150 = scmp.eq.s32.totalorder %s23, 1
      %p151 = por %p149, %p150
      %p153 = scmp.ne.s32.totalorder %s138, %s152
      %p154 = scmp.eq.s32.totalorder %s23, 0
      %p155 = por %p153, %p154
      %s157 = sadd.s32 %s156, 1
      %p160 = scmp.eq.s32.totalorder %s17, 1
      %p161 = scmp.ne.s32.totalorder %s156, %s158
      %p162 = scmp.eq.s32.totalorder %s17, 0
      %p163 = por %p161, %p162
      %p164 = scmp.ne.s32.totalorder %s156, %s158
      %p165 = scmp.eq.s32.totalorder %s22, 1
      %p166 = por %p164, %p165
      %p167 = scmp.ne.s32.totalorder %s158, %s159
      %p168 = scmp.eq.s32.totalorder %s22, 0
      %p169 = por %p167, %p168
      %p170 = scmp.ne.s32.totalorder %s158, %s159
      %p171 = scmp.eq.s32.totalorder %s23, 1
      %p172 = por %p170, %p171
      %p174 = scmp.ne.s32.totalorder %s159, %s173
      %p175 = scmp.eq.s32.totalorder %s23, 0
      %p176 = por %p174, %p175
      %s178 = sadd.s32 %s177, 1
      %p181 = scmp.eq.s32.totalorder %s17, 1
      %p182 = scmp.ne.s32.totalorder %s177, %s179
      %p183 = scmp.eq.s32.totalorder %s17, 0
      %p184 = por %p182, %p183
      %p185 = scmp.ne.s32.totalorder %s177, %s179
      %p186 = scmp.eq.s32.totalorder %s22, 1
      %p187 = por %p185, %p186
      %p188 = scmp.ne.s32.totalorder %s179, %s180
      %p189 = scmp.eq.s32.totalorder %s22, 0
      %p190 = por %p188, %p189
      %p191 = scmp.ne.s32.totalorder %s179, %s180
      %p192 = scmp.eq.s32.totalorder %s23, 1
      %p193 = por %p191, %p192
      %p195 = scmp.ne.s32.totalorder %s180, %s194
      %p196 = scmp.eq.s32.totalorder %s23, 0
      %p197 = por %p195, %p196
      %s198 = ssub.s32 %s17, %s24
      %p199 = scmp.eq.s32.totalorder %s198, 0
      %s201 = sadd.s32 %s200, 1
      %s202 = scalar_select %p199, %s200, %s201
      %p205 = pneg %p199
      %p206 = scmp.eq.s32.totalorder %s17, 1
      %p207 = por %p205, %p206
      %p208 = scmp.ne.s32.totalorder %s200, %s203
      %p209 = scmp.eq.s32.totalorder %s17, 0
      %p210 = por %p208, %p209
      %p211 = scmp.ne.s32.totalorder %s200, %s203
      %p212 = scmp.eq.s32.totalorder %s22, 1
      %p213 = por %p211, %p212
      %p214 = scmp.ne.s32.totalorder %s203, %s204
      %p215 = scmp.eq.s32.totalorder %s22, 0
      %p216 = por %p214, %p215
      %p217 = scmp.ne.s32.totalorder %s203, %s204
      %p218 = scmp.eq.s32.totalorder %s23, 1
      %p219 = por %p217, %p218
      %p221 = scmp.ne.s32.totalorder %s204, %s220
      %p222 = scmp.eq.s32.totalorder %s23, 0
      %p223 = por %p221, %p222
      %p224 = scmp.le.s32.totalorder 1, %s17
      %p225 = scmp.lt.s32.totalorder %s17, 3
      %p226 = pnand %p224, %p225
      %p227 = pneg %p226
      // Predicated region
      $region9: #{tpu_custom_call.1} parent=5 // pred_check
        _
      $region10: #{tpu_custom_call.1} parent=5 // pred_check_branch
        %229 = sbr.rel (%p226) target = $region12
      $region11: #{tpu_custom_call.1} parent=5 // pred_region
        %s230 = ssub.s32 %s17, 1
        // Predicated region
        $region13: #{tpu_custom_call.1} parent=11 // pred_check
          %p231 = pneg %p64
        $region14: #{tpu_custom_call.1} parent=11 // pred_check_branch
          %233 = sbr.rel (%p231) target = $region16
        $region15: #{tpu_custom_call.1} parent=11 // pred_region
          _
        $region16: #{tpu_custom_call.1} parent=11 // pred_fallthru
          _
        // Predicated region
        $region17: #{tpu_custom_call.1} parent=11 // pred_check
          %p234 = pneg %p85
        $region18: #{tpu_custom_call.1} parent=11 // pred_check_branch
          %236 = sbr.rel (%p234) target = $region20
        $region19: #{tpu_custom_call.1} parent=11 // pred_region
          _
        $region20: #{tpu_custom_call.1} parent=11 // pred_fallthru
          _
        // Predicated region
        $region21: #{tpu_custom_call.1} parent=11 // pred_check
          %p237 = pneg %p106
        $region22: #{tpu_custom_call.1} parent=11 // pred_check_branch
          %239 = sbr.rel (%p237) target = $region24
        $region23: #{tpu_custom_call.1} parent=11 // pred_region
          _
        $region24: #{tpu_custom_call.1} parent=11 // pred_fallthru
          _
        // Predicated region
        $region25: #{tpu_custom_call.1} parent=11 // pred_check
          %p240 = pneg %p127
        $region26: #{tpu_custom_call.1} parent=11 // pred_check_branch
          %242 = sbr.rel (%p240) target = $region28
        $region27: #{tpu_custom_call.1} parent=11 // pred_region
          _
        $region28: #{tpu_custom_call.1} parent=11 // pred_fallthru
          _
        // Predicated region
        $region29: #{tpu_custom_call.1} parent=11 // pred_check
          %p243 = pneg %p148
        $region30: #{tpu_custom_call.1} parent=11 // pred_check_branch
          %245 = sbr.rel (%p243) target = $region32
        $region31: #{tpu_custom_call.1} parent=11 // pred_region
          _
        $region32: #{tpu_custom_call.1} parent=11 // pred_fallthru
          _
        // Predicated region
        $region33: #{tpu_custom_call.1} parent=11 // pred_check
          %p246 = pneg %p169
        $region34: #{tpu_custom_call.1} parent=11 // pred_check_branch
          %248 = sbr.rel (%p246) target = $region36
        $region35: #{tpu_custom_call.1} parent=11 // pred_region
          _
        $region36: #{tpu_custom_call.1} parent=11 // pred_fallthru
          _
        // Predicated region
        $region37: #{tpu_custom_call.1} parent=11 // pred_check
          %p249 = pneg %p190
        $region38: #{tpu_custom_call.1} parent=11 // pred_check_branch
          %251 = sbr.rel (%p249) target = $region40
        $region39: #{tpu_custom_call.1} parent=11 // pred_region
          _
        $region40: #{tpu_custom_call.1} parent=11 // pred_fallthru
          _
      $region12: #{tpu_custom_call.1} parent=5 // pred_fallthru
        _
      %p252 = scmp.lt.s32.totalorder %s17, 2
      // Predicated region
      $region41: #{tpu_custom_call.1} parent=5 // pred_check
        %p253 = pneg %p252
      $region42: #{tpu_custom_call.1} parent=5 // pred_check_branch
        %255 = sbr.rel (%p253) target = $region44
      $region43: #{tpu_custom_call.1} parent=5 // pred_region
        // Predicated region
        $region45: #{tpu_custom_call.1} parent=43 // pred_check
          %p256 = pneg %p37
        $region46: #{tpu_custom_call.1} parent=43 // pred_check_branch
          %258 = sbr.rel (%p256) target = $region48
        $region47: #{tpu_custom_call.1} parent=43 // pred_region
          %p259 = scmp.lt.s32.totalorder %s17, 1
          %s260 = scalar_select %p259, %s17, 1
          %s261 = smul.addr %s260, 2
          %s262 = smul.addr %s261, 2
          %s263 = scalar_lea.vmem %s0, %s262
        $region48: #{tpu_custom_call.1} parent=43 // pred_fallthru
          _
      $region44: #{tpu_custom_call.1} parent=5 // pred_fallthru
        _
      %p264 = scmp.le.s32.totalorder 1, %s17
      %p265 = scmp.lt.s32.totalorder %s17, 3
      %p266 = pnand %p264, %p265
      %p267 = pneg %p266
      // Predicated region
      $region49: #{tpu_custom_call.1} parent=5 // pred_check
        _
      $region50: #{tpu_custom_call.1} parent=5 // pred_check_branch
        %269 = sbr.rel (%p266) target = $region52
      $region51: #{tpu_custom_call.1} parent=5 // pred_region
        %s270 = ssub.s32 %s17, 1
        %p271 = scmp.lt.s32.totalorder %s22, 1
        %s272 = scalar_select %p271, %s22, 1
        %s273 = smul.addr %s272, 2
        %s274 = smul.addr %s273, 2
        %s275 = scalar_lea.vmem %s0, %s274
        %p276 = pneg %p43
        %p277 = pneg %p40
        %p278 = pneg %p64
        %p279 = pneg %p61
        %p280 = pneg %p85
        %p281 = pneg %p82
        %p282 = pneg %p106
        %p283 = pneg %p103
        %p284 = pneg %p127
        %p285 = pneg %p124
        %p286 = pneg %p148
        %p287 = pneg %p145
        %p288 = pneg %p169
        %p289 = pneg %p166
        %p290 = pneg %p190
        %p291 = pneg %p187
        %p292 = pneg %p216
        %p293 = pneg %p213
        %s294 = sand.u32 %s203, 1
        %s295 = scalar_lea.sflag [#allocation3], %s294
        %s296 = sand.u32 %s203, 1
        %s297 = smul.addr %s296, 16
        %s298 = scalar_lea.vmem [#allocation2], %s297
        %p299 = scmp.lt.s32.totalorder %s22, 1
        %s300 = scalar_select %p299, %s22, 1
        %s301 = smul.addr %s300, 2
        %s302 = smul.addr %s301, 2
        %s303 = scalar_lea.vmem %s0, %s302
        %v305 = vld [vmem:[%s303] sm:$0xf]
        %v308 = vunpack.c.l.s4 1983009808
        %v309 = vunpack.c.0.s8 %v308
        %v310 = vlaneseq
        %v311 = vshrl.u32 %v310, 7
        %v312 = vsub.s32 %v309, %v311
        %v313 = vrot.slane %v305, %v312
        %v314 = vcombine.high %v313, %v313
        %315 = vrot.lane.b32.xlu0 %v313, 17
        %v316 = vpop.permute.xlu0 %315
        %317 = vrot.lane.b32.xlu0 %v314, 17
        %v318 = vpop.permute.xlu0 %317
        %vm319 = vcmask 138240
        %v320 = vsel %vm319, %v316, %v318
        %vm321 = vcmask 138240
        %v324 = vsel %vm321, 0, %v316
        %v326 = vsel %vm321, %v318, 0
        %v327 = vld [vmem:[%s2] sm:$0xf]
        %vm328 = vcmask 31744
        %v330 = vsel %vm328, %v327, 0
        %vm332 = vcmask 1041408
        %v333 = vsel %vm332, %v324, 0
        %v336 = vsel %vm332, %v320, 0
        %338 = vmatprep.subr.bf16.mxu0 %v336
        %339 = vmatpush1.bf16.msra.mxu0 %v333
        %340 = vmatprep.subr.bf16.mxu0 0
        %341 = vmatpush1.bf16.msra.mxu0 0
        %342 = vmatprep.subr.bf16.mxu0 0
        %343 = vmatpush1.bf16.msra.mxu0 0
        %344 = vmatprep.subr.bf16.mxu0 0
        %345 = vmatpush1.bf16.msra.mxu0 0
        %346 = vmatprep.subr.bf16.mxu0 0
        %347 = vmatpush1.bf16.msra.mxu0 0
        %348 = vmatprep.subr.bf16.mxu0 0
        %349 = vmatpush1.bf16.msra.mxu0 0
        %350 = vmatprep.subr.bf16.mxu0 0
        %351 = vmatpush1.bf16.msra.mxu0 0
        %352 = vmatprep.subr.bf16.mxu0 0
        %353 = vmatpush1.bf16.msra.mxu0 0
        %354 = vmatprep.subr.bf16.mxu0 0
        %355 = vmatpush1.bf16.msra.mxu0 0
        %356 = vmatprep.subr.bf16.mxu0 0
        %357 = vmatpush1.bf16.msra.mxu0 0
        %358 = vmatprep.subr.bf16.mxu0 0
        %359 = vmatpush1.bf16.msra.mxu0 0
        %360 = vmatprep.subr.bf16.mxu0 0
        %361 = vmatpush1.bf16.msra.mxu0 0
        %362 = vmatprep.subr.bf16.mxu0 0
        %363 = vmatpush1.bf16.msra.mxu0 0
        %364 = vmatprep.subr.bf16.mxu0 0
        %365 = vmatpush1.bf16.msra.mxu0 0
        %366 = vmatprep.subr.bf16.mxu0 0
        %367 = vmatpush1.bf16.msra.mxu0 0
        %368 = vmatprep.subr.bf16.mxu0 0
        %369 = vmatpush1.bf16.msra.mxu0 0
        %370 = vmatprep.mubr.bf16.mxu0 0
        %371 = vmatmul.mubr.bf16.gmra.mrb[0].mxu0 %v330
        %v372 = vpop.f32.mrb[0].mxu0
        %v373 = vadd.f32 0.0, %v372
        %v374 = vpop.f32.mrb[0].mxu0
        %v375 = vadd.f32 0.0, %v374
        %v376 = vpop.f32.mrb[0].mxu0
        %v377 = vpop.f32.mrb[0].mxu0
        %378 = vdwg.mxu0
        %v379 = vld [vmem:[%s1] sm:$0x3]
        %v381 = vlaneseq
        %v382 = vshrl.u32 %v381, 7
        %v383 = vsub.s32 0, %v382
        %v384 = vrot.slane %v379, %v383
        %v385 = vlaneseq
        %v386 = vshrl.u32 %v385, 7
        %v387 = vsub.s32 1, %v386
        %v388 = vrot.slane %v379, %v387
        %v391 = vmul.f32 %v373, %v384
        %v392 = vmul.f32 %v375, %v388
        %v393 = vadd.f32 %v391, 0.0
        %v394 = vadd.f32 %v392, 0.0
        %s395 = scalar_lea.vmem %s2, 4
        %v396 = vld [vmem:[%s395] sm:$0xf]
        %399 = vrot.lane.b32.xlu0 %v324, 127
        %v400 = vpop.permute.xlu0 %399
        %401 = vrot.lane.b32.xlu0 %v320, 127
        %v402 = vpop.permute.xlu0 %401
        %403 = vrot.lane.b32.xlu0 %v326, 127
        %v404 = vpop.permute.xlu0 %403
        %vm405 = vcmask 1039360
        %v406 = vsel %vm405, %v400, %v402
        %v407 = vsel %vm405, %v402, %v404
        %v409 = vsel %vm328, %v396, 0
        %v412 = vsel %vm332, %v406, 0
        %v415 = vsel %vm332, %v407, 0
        %417 = vmatprep.subr.bf16.mxu0 %v415
        %418 = vmatpush1.bf16.msra.mxu0 %v412
        %419 = vmatprep.subr.bf16.mxu0 0
        %420 = vmatpush1.bf16.msra.mxu0 0
        %421 = vmatprep.subr.bf16.mxu0 0
        %422 = vmatpush1.bf16.msra.mxu0 0
        %423 = vmatprep.subr.bf16.mxu0 0
        %424 = vmatpush1.bf16.msra.mxu0 0
        %425 = vmatprep.subr.bf16.mxu0 0
        %426 = vmatpush1.bf16.msra.mxu0 0
        %427 = vmatprep.subr.bf16.mxu0 0
        %428 = vmatpush1.bf16.msra.mxu0 0
        %429 = vmatprep.subr.bf16.mxu0 0
        %430 = vmatpush1.bf16.msra.mxu0 0
        %431 = vmatprep.subr.bf16.mxu0 0
        %432 = vmatpush1.bf16.msra.mxu0 0
        %433 = vmatprep.subr.bf16.mxu0 0
        %434 = vmatpush1.bf16.msra.mxu0 0
        %435 = vmatprep.subr.bf16.mxu0 0
        %436 = vmatpush1.bf16.msra.mxu0 0
        %437 = vmatprep.subr.bf16.mxu0 0
        %438 = vmatpush1.bf16.msra.mxu0 0
        %439 = vmatprep.subr.bf16.mxu0 0
        %440 = vmatpush1.bf16.msra.mxu0 0
        %441 = vmatprep.subr.bf16.mxu0 0
        %442 = vmatpush1.bf16.msra.mxu0 0
        %443 = vmatprep.subr.bf16.mxu0 0
        %444 = vmatpush1.bf16.msra.mxu0 0
        %445 = vmatprep.subr.bf16.mxu0 0
        %446 = vmatpush1.bf16.msra.mxu0 0
        %447 = vmatprep.subr.bf16.mxu0 0
        %448 = vmatpush1.bf16.msra.mxu0 0
        %449 = vmatprep.mubr.bf16.mxu0 0
        %450 = vmatmul.mubr.bf16.gmra.mrb[0].mxu0 %v409
        %v451 = vpop.f32.mrb[0].mxu0
        %v452 = vadd.f32 0.0, %v451
        %v453 = vpop.f32.mrb[0].mxu0
        %v454 = vadd.f32 0.0, %v453
        %v455 = vpop.f32.mrb[0].mxu0
        %v456 = vpop.f32.mrb[0].mxu0
        %457 = vdwg.mxu0
        %s458 = scalar_lea.vmem %s1, 2
        %v459 = vld [vmem:[%s458] sm:$0x3]
        %v461 = vlaneseq
        %v462 = vshrl.u32 %v461, 7
        %v463 = vsub.s32 0, %v462
        %v464 = vrot.slane %v459, %v463
        %v465 = vlaneseq
        %v466 = vshrl.u32 %v465, 7
        %v467 = vsub.s32 1, %v466
        %v468 = vrot.slane %v459, %v467
        %v471 = vmul.f32 %v452, %v464
        %v472 = vmul.f32 %v454, %v468
        %v473 = vadd.f32 %v393, %v471
        %v474 = vadd.f32 %v394, %v472
        %s475 = scalar_lea.vmem %s2, 8
        %v476 = vld [vmem:[%s475] sm:$0xf]
        %477 = vrot.lane.b32.xlu0 %v324, 126
        %v478 = vpop.permute.xlu0 %477
        %479 = vrot.lane.b32.xlu0 %v320, 126
        %v480 = vpop.permute.xlu0 %479
        %481 = vrot.lane.b32.xlu0 %v326, 126
        %v482 = vpop.permute.xlu0 %481
        %vm483 = vcmask 1031168
        %v484 = vsel %vm483, %v478, %v480
        %v485 = vsel %vm483, %v480, %v482
        %v487 = vsel %vm328, %v476, 0
        %v490 = vsel %vm332, %v484, 0
        %v493 = vsel %vm332, %v485, 0
        %495 = vmatprep.subr.bf16.mxu0 %v493
        %496 = vmatpush1.bf16.msra.mxu0 %v490
        %497 = vmatprep.subr.bf16.mxu0 0
        %498 = vmatpush1.bf16.msra.mxu0 0
        %499 = vmatprep.subr.bf16.mxu0 0
        %500 = vmatpush1.bf16.msra.mxu0 0
        %501 = vmatprep.subr.bf16.mxu0 0
        %502 = vmatpush1.bf16.msra.mxu0 0
        %503 = vmatprep.subr.bf16.mxu0 0
        %504 = vmatpush1.bf16.msra.mxu0 0
        %505 = vmatprep.subr.bf16.mxu0 0
        %506 = vmatpush1.bf16.msra.mxu0 0
        %507 = vmatprep.subr.bf16.mxu0 0
        %508 = vmatpush1.bf16.msra.mxu0 0
        %509 = vmatprep.subr.bf16.mxu0 0
        %510 = vmatpush1.bf16.msra.mxu0 0
        %511 = vmatprep.subr.bf16.mxu0 0
        %512 = vmatpush1.bf16.msra.mxu0 0
        %513 = vmatprep.subr.bf16.mxu0 0
        %514 = vmatpush1.bf16.msra.mxu0 0
        %515 = vmatprep.subr.bf16.mxu0 0
        %516 = vmatpush1.bf16.msra.mxu0 0
        %517 = vmatprep.subr.bf16.mxu0 0
        %518 = vmatpush1.bf16.msra.mxu0 0
        %519 = vmatprep.subr.bf16.mxu0 0
        %520 = vmatpush1.bf16.msra.mxu0 0
        %521 = vmatprep.subr.bf16.mxu0 0
        %522 = vmatpush1.bf16.msra.mxu0 0
        %523 = vmatprep.subr.bf16.mxu0 0
        %524 = vmatpush1.bf16.msra.mxu0 0
        %525 = vmatprep.subr.bf16.mxu0 0
        %526 = vmatpush1.bf16.msra.mxu0 0
        %527 = vmatprep.mubr.bf16.mxu0 0
        %528 = vmatmul.mubr.bf16.gmra.mrb[0].mxu0 %v487
        %v529 = vpop.f32.mrb[0].mxu0
        %v530 = vadd.f32 0.0, %v529
        %v531 = vpop.f32.mrb[0].mxu0
        %v532 = vadd.f32 0.0, %v531
        %v533 = vpop.f32.mrb[0].mxu0
        %v534 = vpop.f32.mrb[0].mxu0
        %535 = vdwg.mxu0
        %s536 = scalar_lea.vmem %s1, 4
        %v537 = vld [vmem:[%s536] sm:$0x3]
        %v539 = vlaneseq
        %v540 = vshrl.u32 %v539, 7
        %v541 = vsub.s32 0, %v540
        %v542 = vrot.slane %v537, %v541
        %v543 = vlaneseq
        %v544 = vshrl.u32 %v543, 7
        %v545 = vsub.s32 1, %v544
        %v546 = vrot.slane %v537, %v545
        %v549 = vmul.f32 %v530, %v542
        %v550 = vmul.f32 %v532, %v546
        %v551 = vadd.f32 %v473, %v549
        %v552 = vadd.f32 %v474, %v550
        %s553 = scalar_lea.vmem %s2, 12
        %v554 = vld [vmem:[%s553] sm:$0xf]
        %555 = vrot.lane.b32.xlu0 %v324, 112
        %v556 = vpop.permute.xlu0 %555
        %557 = vrot.lane.b32.xlu0 %v320, 112
        %v558 = vpop.permute.xlu0 %557
        %559 = vrot.lane.b32.xlu0 %v326, 112
        %v560 = vpop.permute.xlu0 %559
        %vm561 = vcmask 916480
        %v562 = vsel %vm561, %v556, %v558
        %v563 = vsel %vm561, %v558, %v560
        %v565 = vsel %vm328, %v554, 0
        %v568 = vsel %vm332, %v562, 0
        %v571 = vsel %vm332, %v563, 0
        %573 = vmatprep.subr.bf16.mxu0 %v571
        %574 = vmatpush1.bf16.msra.mxu0 %v568
        %575 = vmatprep.subr.bf16.mxu0 0
        %576 = vmatpush1.bf16.msra.mxu0 0
        %577 = vmatprep.subr.bf16.mxu0 0
        %578 = vmatpush1.bf16.msra.mxu0 0
        %579 = vmatprep.subr.bf16.mxu0 0
        %580 = vmatpush1.bf16.msra.mxu0 0
        %581 = vmatprep.subr.bf16.mxu0 0
        %582 = vmatpush1.bf16.msra.mxu0 0
        %583 = vmatprep.subr.bf16.mxu0 0
        %584 = vmatpush1.bf16.msra.mxu0 0
        %585 = vmatprep.subr.bf16.mxu0 0
        %586 = vmatpush1.bf16.msra.mxu0 0
        %587 = vmatprep.subr.bf16.mxu0 0
        %588 = vmatpush1.bf16.msra.mxu0 0
        %589 = vmatprep.subr.bf16.mxu0 0
        %590 = vmatpush1.bf16.msra.mxu0 0
        %591 = vmatprep.subr.bf16.mxu0 0
        %592 = vmatpush1.bf16.msra.mxu0 0
        %593 = vmatprep.subr.bf16.mxu0 0
        %594 = vmatpush1.bf16.msra.mxu0 0
        %595 = vmatprep.subr.bf16.mxu0 0
        %596 = vmatpush1.bf16.msra.mxu0 0
        %597 = vmatprep.subr.bf16.mxu0 0
        %598 = vmatpush1.bf16.msra.mxu0 0
        %599 = vmatprep.subr.bf16.mxu0 0
        %600 = vmatpush1.bf16.msra.mxu0 0
        %601 = vmatprep.subr.bf16.mxu0 0
        %602 = vmatpush1.bf16.msra.mxu0 0
        %603 = vmatprep.subr.bf16.mxu0 0
        %604 = vmatpush1.bf16.msra.mxu0 0
        %605 = vmatprep.mubr.bf16.mxu0 0
        %606 = vmatmul.mubr.bf16.gmra.mrb[0].mxu0 %v565
        %v607 = vpop.f32.mrb[0].mxu0
        %v608 = vadd.f32 0.0, %v607
        %v609 = vpop.f32.mrb[0].mxu0
        %v610 = vadd.f32 0.0, %v609
        %v611 = vpop.f32.mrb[0].mxu0
        %v612 = vpop.f32.mrb[0].mxu0
        %613 = vdwg.mxu0
        %s614 = scalar_lea.vmem %s1, 6
        %v615 = vld [vmem:[%s614] sm:$0x3]
        %v617 = vlaneseq
        %v618 = vshrl.u32 %v617, 7
        %v619 = vsub.s32 0, %v618
        %v620 = vrot.slane %v615, %v619
        %v621 = vlaneseq
        %v622 = vshrl.u32 %v621, 7
        %v623 = vsub.s32 1, %v622
        %v624 = vrot.slane %v615, %v623
        %v627 = vmul.f32 %v608, %v620
        %v628 = vmul.f32 %v610, %v624
        %v629 = vadd.f32 %v551, %v627
        %v630 = vadd.f32 %v552, %v628
        %s631 = scalar_lea.vmem %s2, 16
        %v632 = vld [vmem:[%s631] sm:$0xf]
        %633 = vrot.lane.b32.xlu0 %v324, 111
        %v634 = vpop.permute.xlu0 %633
        %635 = vrot.lane.b32.xlu0 %v320, 111
        %v636 = vpop.permute.xlu0 %635
        %637 = vrot.lane.b32.xlu0 %v326, 111
        %v638 = vpop.permute.xlu0 %637
        %vm639 = vcmask 908288
        %v640 = vsel %vm639, %v634, %v636
        %v641 = vsel %vm639, %v636, %v638
        %v643 = vsel %vm328, %v632, 0
        %v646 = vsel %vm332, %v640, 0
        %v649 = vsel %vm332, %v641, 0
        %651 = vmatprep.subr.bf16.mxu0 %v649
        %652 = vmatpush1.bf16.msra.mxu0 %v646
        %653 = vmatprep.subr.bf16.mxu0 0
        %654 = vmatpush1.bf16.msra.mxu0 0
        %655 = vmatprep.subr.bf16.mxu0 0
        %656 = vmatpush1.bf16.msra.mxu0 0
        %657 = vmatprep.subr.bf16.mxu0 0
        %658 = vmatpush1.bf16.msra.mxu0 0
        %659 = vmatprep.subr.bf16.mxu0 0
        %660 = vmatpush1.bf16.msra.mxu0 0
        %661 = vmatprep.subr.bf16.mxu0 0
        %662 = vmatpush1.bf16.msra.mxu0 0
        %663 = vmatprep.subr.bf16.mxu0 0
        %664 = vmatpush1.bf16.msra.mxu0 0
        %665 = vmatprep.subr.bf16.mxu0 0
        %666 = vmatpush1.bf16.msra.mxu0 0
        %667 = vmatprep.subr.bf16.mxu0 0
        %668 = vmatpush1.bf16.msra.mxu0 0
        %669 = vmatprep.subr.bf16.mxu0 0
        %670 = vmatpush1.bf16.msra.mxu0 0
        %671 = vmatprep.subr.bf16.mxu0 0
        %672 = vmatpush1.bf16.msra.mxu0 0
        %673 = vmatprep.subr.bf16.mxu0 0
        %674 = vmatpush1.bf16.msra.mxu0 0
        %675 = vmatprep.subr.bf16.mxu0 0
        %676 = vmatpush1.bf16.msra.mxu0 0
        %677 = vmatprep.subr.bf16.mxu0 0
        %678 = vmatpush1.bf16.msra.mxu0 0
        %679 = vmatprep.subr.bf16.mxu0 0
        %680 = vmatpush1.bf16.msra.mxu0 0
        %681 = vmatprep.subr.bf16.mxu0 0
        %682 = vmatpush1.bf16.msra.mxu0 0
        %683 = vmatprep.mubr.bf16.mxu0 0
        %684 = vmatmul.mubr.bf16.gmra.mrb[0].mxu0 %v643
        %v685 = vpop.f32.mrb[0].mxu0
        %v686 = vadd.f32 0.0, %v685
        %v687 = vpop.f32.mrb[0].mxu0
        %v688 = vadd.f32 0.0, %v687
        %v689 = vpop.f32.mrb[0].mxu0
        %v690 = vpop.f32.mrb[0].mxu0
        %691 = vdwg.mxu0
        %v692 = vadd.f32 %v629, %v686
        %v693 = vadd.f32 %v630, %v688
        %s694 = scalar_lea.vmem %s2, 20
        %v695 = vld [vmem:[%s694] sm:$0xf]
        %696 = vrot.lane.b32.xlu0 %v324, 110
        %v697 = vpop.permute.xlu0 %696
        %698 = vrot.lane.b32.xlu0 %v320, 110
        %v699 = vpop.permute.xlu0 %698
        %700 = vrot.lane.b32.xlu0 %v326, 110
        %v701 = vpop.permute.xlu0 %700
        %vm702 = vcmask 900096
        %v703 = vsel %vm702, %v697, %v699
        %v704 = vsel %vm702, %v699, %v701
        %v706 = vsel %vm328, %v695, 0
        %v709 = vsel %vm332, %v703, 0
        %v712 = vsel %vm332, %v704, 0
        %714 = vmatprep.subr.bf16.mxu0 %v712
        %715 = vmatpush1.bf16.msra.mxu0 %v709
        %716 = vmatprep.subr.bf16.mxu0 0
        %717 = vmatpush1.bf16.msra.mxu0 0
        %718 = vmatprep.subr.bf16.mxu0 0
        %719 = vmatpush1.bf16.msra.mxu0 0
        %720 = vmatprep.subr.bf16.mxu0 0
        %721 = vmatpush1.bf16.msra.mxu0 0
        %722 = vmatprep.subr.bf16.mxu0 0
        %723 = vmatpush1.bf16.msra.mxu0 0
        %724 = vmatprep.subr.bf16.mxu0 0
        %725 = vmatpush1.bf16.msra.mxu0 0
        %726 = vmatprep.subr.bf16.mxu0 0
        %727 = vmatpush1.bf16.msra.mxu0 0
        %728 = vmatprep.subr.bf16.mxu0 0
        %729 = vmatpush1.bf16.msra.mxu0 0
        %730 = vmatprep.subr.bf16.mxu0 0
        %731 = vmatpush1.bf16.msra.mxu0 0
        %732 = vmatprep.subr.bf16.mxu0 0
        %733 = vmatpush1.bf16.msra.mxu0 0
        %734 = vmatprep.subr.bf16.mxu0 0
        %735 = vmatpush1.bf16.msra.mxu0 0
        %736 = vmatprep.subr.bf16.mxu0 0
        %737 = vmatpush1.bf16.msra.mxu0 0
        %738 = vmatprep.subr.bf16.mxu0 0
        %739 = vmatpush1.bf16.msra.mxu0 0
        %740 = vmatprep.subr.bf16.mxu0 0
        %741 = vmatpush1.bf16.msra.mxu0 0
        %742 = vmatprep.subr.bf16.mxu0 0
        %743 = vmatpush1.bf16.msra.mxu0 0
        %744 = vmatprep.subr.bf16.mxu0 0
        %745 = vmatpush1.bf16.msra.mxu0 0
        %746 = vmatprep.mubr.bf16.mxu0 0
        %747 = vmatmul.mubr.bf16.gmra.mrb[0].mxu0 %v706
        %v748 = vpop.f32.mrb[0].mxu0
        %v749 = vadd.f32 0.0, %v748
        %v750 = vpop.f32.mrb[0].mxu0
        %v751 = vadd.f32 0.0, %v750
        %v752 = vpop.f32.mrb[0].mxu0
        %v753 = vpop.f32.mrb[0].mxu0
        %754 = vdwg.mxu0
        %s755 = scalar_lea.vmem %s1, 10
        %v756 = vld [vmem:[%s755] sm:$0x3]
        %v758 = vlaneseq
        %v759 = vshrl.u32 %v758, 7
        %v760 = vsub.s32 0, %v759
        %v761 = vrot.slane %v756, %v760
        %v762 = vlaneseq
        %v763 = vshrl.u32 %v762, 7
        %v764 = vsub.s32 1, %v763
        %v765 = vrot.slane %v756, %v764
        %v768 = vmul.f32 %v749, %v761
        %v769 = vmul.f32 %v751, %v765
        %v770 = vadd.f32 %v692, %v768
        %v771 = vadd.f32 %v693, %v769
        %s772 = scalar_lea.vmem %s2, 24
        %v773 = vld [vmem:[%s772] sm:$0xf]
        %774 = vrot.lane.b32.xlu0 %v324, 96
        %v775 = vpop.permute.xlu0 %774
        %776 = vrot.lane.b32.xlu0 %v320, 96
        %v777 = vpop.permute.xlu0 %776
        %778 = vrot.lane.b32.xlu0 %v326, 96
        %v779 = vpop.permute.xlu0 %778
        %vm780 = vcmask 785408
        %v781 = vsel %vm780, %v775, %v777
        %v782 = vsel %vm780, %v777, %v779
        %v784 = vsel %vm328, %v773, 0
        %v787 = vsel %vm332, %v781, 0
        %v790 = vsel %vm332, %v782, 0
        %792 = vmatprep.subr.bf16.mxu0 %v790
        %793 = vmatpush1.bf16.msra.mxu0 %v787
        %794 = vmatprep.subr.bf16.mxu0 0
        %795 = vmatpush1.bf16.msra.mxu0 0
        %796 = vmatprep.subr.bf16.mxu0 0
        %797 = vmatpush1.bf16.msra.mxu0 0
        %798 = vmatprep.subr.bf16.mxu0 0
        %799 = vmatpush1.bf16.msra.mxu0 0
        %800 = vmatprep.subr.bf16.mxu0 0
        %801 = vmatpush1.bf16.msra.mxu0 0
        %802 = vmatprep.subr.bf16.mxu0 0
        %803 = vmatpush1.bf16.msra.mxu0 0
        %804 = vmatprep.subr.bf16.mxu0 0
        %805 = vmatpush1.bf16.msra.mxu0 0
        %806 = vmatprep.subr.bf16.mxu0 0
        %807 = vmatpush1.bf16.msra.mxu0 0
        %808 = vmatprep.subr.bf16.mxu0 0
        %809 = vmatpush1.bf16.msra.mxu0 0
        %810 = vmatprep.subr.bf16.mxu0 0
        %811 = vmatpush1.bf16.msra.mxu0 0
        %812 = vmatprep.subr.bf16.mxu0 0
        %813 = vmatpush1.bf16.msra.mxu0 0
        %814 = vmatprep.subr.bf16.mxu0 0
        %815 = vmatpush1.bf16.msra.mxu0 0
        %816 = vmatprep.subr.bf16.mxu0 0
        %817 = vmatpush1.bf16.msra.mxu0 0
        %818 = vmatprep.subr.bf16.mxu0 0
        %819 = vmatpush1.bf16.msra.mxu0 0
        %820 = vmatprep.subr.bf16.mxu0 0
        %821 = vmatpush1.bf16.msra.mxu0 0
        %822 = vmatprep.subr.bf16.mxu0 0
        %823 = vmatpush1.bf16.msra.mxu0 0
        %824 = vmatprep.mubr.bf16.mxu0 0
        %825 = vmatmul.mubr.bf16.gmra.mrb[0].mxu0 %v784
        %v826 = vpop.f32.mrb[0].mxu0
        %v827 = vadd.f32 0.0, %v826
        %v828 = vpop.f32.mrb[0].mxu0
        %v829 = vadd.f32 0.0, %v828
        %v830 = vpop.f32.mrb[0].mxu0
        %v831 = vpop.f32.mrb[0].mxu0
        %832 = vdwg.mxu0
        %s833 = scalar_lea.vmem %s1, 12
        %v834 = vld [vmem:[%s833] sm:$0x3]
        %v836 = vlaneseq
        %v837 = vshrl.u32 %v836, 7
        %v838 = vsub.s32 0, %v837
        %v839 = vrot.slane %v834, %v838
        %v840 = vlaneseq
        %v841 = vshrl.u32 %v840, 7
        %v842 = vsub.s32 1, %v841
        %v843 = vrot.slane %v834, %v842
        %v846 = vmul.f32 %v827, %v839
        %v847 = vmul.f32 %v829, %v843
        %v848 = vadd.f32 %v770, %v846
        %v849 = vadd.f32 %v771, %v847
        %s850 = scalar_lea.vmem %s2, 28
        %v851 = vld [vmem:[%s850] sm:$0xf]
        %852 = vrot.lane.b32.xlu0 %v324, 95
        %v853 = vpop.permute.xlu0 %852
        %854 = vrot.lane.b32.xlu0 %v320, 95
        %v855 = vpop.permute.xlu0 %854
        %856 = vrot.lane.b32.xlu0 %v326, 95
        %v857 = vpop.permute.xlu0 %856
        %vm858 = vcmask 777216
        %v859 = vsel %vm858, %v853, %v855
        %v860 = vsel %vm858, %v855, %v857
        %v862 = vsel %vm328, %v851, 0
        %v865 = vsel %vm332, %v859, 0
        %v868 = vsel %vm332, %v860, 0
        %870 = vmatprep.subr.bf16.mxu0 %v868
        %871 = vmatpush1.bf16.msra.mxu0 %v865
        %872 = vmatprep.subr.bf16.mxu0 0
        %873 = vmatpush1.bf16.msra.mxu0 0
        %874 = vmatprep.subr.bf16.mxu0 0
        %875 = vmatpush1.bf16.msra.mxu0 0
        %876 = vmatprep.subr.bf16.mxu0 0
        %877 = vmatpush1.bf16.msra.mxu0 0
        %878 = vmatprep.subr.bf16.mxu0 0
        %879 = vmatpush1.bf16.msra.mxu0 0
        %880 = vmatprep.subr.bf16.mxu0 0
        %881 = vmatpush1.bf16.msra.mxu0 0
        %882 = vmatprep.subr.bf16.mxu0 0
        %883 = vmatpush1.bf16.msra.mxu0 0
        %884 = vmatprep.subr.bf16.mxu0 0
        %885 = vmatpush1.bf16.msra.mxu0 0
        %886 = vmatprep.subr.bf16.mxu0 0
        %887 = vmatpush1.bf16.msra.mxu0 0
        %888 = vmatprep.subr.bf16.mxu0 0
        %889 = vmatpush1.bf16.msra.mxu0 0
        %890 = vmatprep.subr.bf16.mxu0 0
        %891 = vmatpush1.bf16.msra.mxu0 0
        %892 = vmatprep.subr.bf16.mxu0 0
        %893 = vmatpush1.bf16.msra.mxu0 0
        %894 = vmatprep.subr.bf16.mxu0 0
        %895 = vmatpush1.bf16.msra.mxu0 0
        %896 = vmatprep.subr.bf16.mxu0 0
        %897 = vmatpush1.bf16.msra.mxu0 0
        %898 = vmatprep.subr.bf16.mxu0 0
        %899 = vmatpush1.bf16.msra.mxu0 0
        %900 = vmatprep.subr.bf16.mxu0 0
        %901 = vmatpush1.bf16.msra.mxu0 0
        %902 = vmatprep.mubr.bf16.mxu0 0
        %903 = vmatmul.mubr.bf16.gmra.mrb[0].mxu0 %v862
        %v904 = vpop.f32.mrb[0].mxu0
        %v905 = vadd.f32 0.0, %v904
        %v906 = vpop.f32.mrb[0].mxu0
        %v907 = vadd.f32 0.0, %v906
        %v908 = vpop.f32.mrb[0].mxu0
        %v909 = vpop.f32.mrb[0].mxu0
        %910 = vdwg.mxu0
        %s911 = scalar_lea.vmem %s1, 14
        %v912 = vld [vmem:[%s911] sm:$0x3]
        %v914 = vlaneseq
        %v915 = vshrl.u32 %v914, 7
        %v916 = vsub.s32 0, %v915
        %v917 = vrot.slane %v912, %v916
        %v918 = vlaneseq
        %v919 = vshrl.u32 %v918, 7
        %v920 = vsub.s32 1, %v919
        %v921 = vrot.slane %v912, %v920
        %v924 = vmul.f32 %v905, %v917
        %v925 = vmul.f32 %v907, %v921
        %v926 = vadd.f32 %v848, %v924
        %v927 = vadd.f32 %v849, %v925
        %s928 = scalar_lea.vmem %s2, 32
        %v929 = vld [vmem:[%s928] sm:$0xf]
        %930 = vrot.lane.b32.xlu0 %v324, 94
        %v931 = vpop.permute.xlu0 %930
        %932 = vrot.lane.b32.xlu0 %v320, 94
        %v933 = vpop.permute.xlu0 %932
        %934 = vrot.lane.b32.xlu0 %v326, 94
        %v935 = vpop.permute.xlu0 %934
        %vm936 = vcmask 769024
        %v937 = vsel %vm936, %v931, %v933
        %v938 = vsel %vm936, %v933, %v935
        %v940 = vsel %vm328, %v929, 0
        %v943 = vsel %vm332, %v937, 0
        %v946 = vsel %vm332, %v938, 0
        %948 = vmatprep.subr.bf16.mxu0 %v946
        %949 = vmatpush1.bf16.msra.mxu0 %v943
        %950 = vmatprep.subr.bf16.mxu0 0
        %951 = vmatpush1.bf16.msra.mxu0 0
        %952 = vmatprep.subr.bf16.mxu0 0
        %953 = vmatpush1.bf16.msra.mxu0 0
        %954 = vmatprep.subr.bf16.mxu0 0
        %955 = vmatpush1.bf16.msra.mxu0 0
        %956 = vmatprep.subr.bf16.mxu0 0
        %957 = vmatpush1.bf16.msra.mxu0 0
        %958 = vmatprep.subr.bf16.mxu0 0
        %959 = vmatpush1.bf16.msra.mxu0 0
        %960 = vmatprep.subr.bf16.mxu0 0
        %961 = vmatpush1.bf16.msra.mxu0 0
        %962 = vmatprep.subr.bf16.mxu0 0
        %963 = vmatpush1.bf16.msra.mxu0 0
        %964 = vmatprep.subr.bf16.mxu0 0
        %965 = vmatpush1.bf16.msra.mxu0 0
        %966 = vmatprep.subr.bf16.mxu0 0
        %967 = vmatpush1.bf16.msra.mxu0 0
        %968 = vmatprep.subr.bf16.mxu0 0
        %969 = vmatpush1.bf16.msra.mxu0 0
        %970 = vmatprep.subr.bf16.mxu0 0
        %971 = vmatpush1.bf16.msra.mxu0 0
        %972 = vmatprep.subr.bf16.mxu0 0
        %973 = vmatpush1.bf16.msra.mxu0 0
        %974 = vmatprep.subr.bf16.mxu0 0
        %975 = vmatpush1.bf16.msra.mxu0 0
        %976 = vmatprep.subr.bf16.mxu0 0
        %977 = vmatpush1.bf16.msra.mxu0 0
        %978 = vmatprep.subr.bf16.mxu0 0
        %979 = vmatpush1.bf16.msra.mxu0 0
        %980 = vmatprep.mubr.bf16.mxu0 0
        %981 = vmatmul.mubr.bf16.gmra.mrb[0].mxu0 %v940
        %v982 = vpop.f32.mrb[0].mxu0
        %v983 = vadd.f32 0.0, %v982
        %v984 = vpop.f32.mrb[0].mxu0
        %v985 = vadd.f32 0.0, %v984
        %v986 = vpop.f32.mrb[0].mxu0
        %v987 = vpop.f32.mrb[0].mxu0
        %988 = vdwg.mxu0
        %s989 = scalar_lea.vmem %s1, 16
        %v990 = vld [vmem:[%s989] sm:$0x3]
        %v992 = vlaneseq
        %v993 = vshrl.u32 %v992, 7
        %v994 = vsub.s32 0, %v993
        %v995 = vrot.slane %v990, %v994
        %v996 = vlaneseq
        %v997 = vshrl.u32 %v996, 7
        %v998 = vsub.s32 1, %v997
        %v999 = vrot.slane %v990, %v998
        %v1002 = vmul.f32 %v983, %v995
        %v1003 = vmul.f32 %v985, %v999
        %v1004 = vadd.f32 %v926, %v1002
        %v1005 = vadd.f32 %v927, %v1003
        %v1006 = vld [vmem:[%s3] sm:$0xff]
        %1008 = vset.pattern.permute.xlu0 0
        %1009 = vperm.xlu0 %1008, %v1006
        %v1010 = vpop.permute.xlu0 %1009
        %v1012 = vmul.f32 %v1004, %v1010
        %v1013 = vmul.f32 %v1005, %v1010
        %v1014 = vld [vmem:[%s4] sm:$0xff]
        %1016 = vset.pattern.permute.xlu0 0
        %1017 = vperm.xlu0 %1016, %v1014
        %v1018 = vpop.permute.xlu0 %1017
        %v1020 = vadd.f32 %v1012, %v1018
        %v1021 = vadd.f32 %v1013, %v1018
        %v1022 = vmax.f32 %v1020, 0.0
        %v1023 = vmax.f32 %v1021, 0.0
        %v1024 = vpack.c.bf16 %v1022, %v1022
        %v1025 = vpack.c.bf16 %v1023, %v1023
        %1028 = vrot.lane.b32.xlu0 %v1024, 17
        %v1029 = vpop.permute.xlu0 %1028
        %1030 = vrot.lane.b32.xlu0 %v1025, 17
        %v1031 = vpop.permute.xlu0 %1030
        %v1032 = vsel %vm319, %v1029, %v1031
        %v1034 = vsel %vm321, 0, %v1029
        %v1036 = vsel %vm321, %v1031, 0
        %v1037 = vld [vmem:[%s5] sm:$0xf]
        %vm1038 = vcmask 64512
        %v1040 = vsel %vm1038, %v1037, 0
        %vm1042 = vcmask 1043456
        %v1043 = vsel %vm1042, %v1034, 0
        %v1046 = vsel %vm1042, %v1032, 0
        %1048 = vmatprep.subr.bf16.mxu0 %v1046
        %1049 = vmatpush1.bf16.msra.mxu0 %v1043
        %1050 = vmatprep.subr.bf16.mxu0 0
        %1051 = vmatpush1.bf16.msra.mxu0 0
        %1052 = vmatprep.subr.bf16.mxu0 0
        %1053 = vmatpush1.bf16.msra.mxu0 0
        %1054 = vmatprep.subr.bf16.mxu0 0
        %1055 = vmatpush1.bf16.msra.mxu0 0
        %1056 = vmatprep.subr.bf16.mxu0 0
        %1057 = vmatpush1.bf16.msra.mxu0 0
        %1058 = vmatprep.subr.bf16.mxu0 0
        %1059 = vmatpush1.bf16.msra.mxu0 0
        %1060 = vmatprep.subr.bf16.mxu0 0
        %1061 = vmatpush1.bf16.msra.mxu0 0
        %1062 = vmatprep.subr.bf16.mxu0 0
        %1063 = vmatpush1.bf16.msra.mxu0 0
        %1064 = vmatprep.subr.bf16.mxu0 0
        %1065 = vmatpush1.bf16.msra.mxu0 0
        %1066 = vmatprep.subr.bf16.mxu0 0
        %1067 = vmatpush1.bf16.msra.mxu0 0
        %1068 = vmatprep.subr.bf16.mxu0 0
        %1069 = vmatpush1.bf16.msra.mxu0 0
        %1070 = vmatprep.subr.bf16.mxu0 0
        %1071 = vmatpush1.bf16.msra.mxu0 0
        %1072 = vmatprep.subr.bf16.mxu0 0
        %1073 = vmatpush1.bf16.msra.mxu0 0
        %1074 = vmatprep.subr.bf16.mxu0 0
        %1075 = vmatpush1.bf16.msra.mxu0 0
        %1076 = vmatprep.subr.bf16.mxu0 0
        %1077 = vmatpush1.bf16.msra.mxu0 0
        %1078 = vmatprep.subr.bf16.mxu0 0
        %1079 = vmatpush1.bf16.msra.mxu0 0
        %1080 = vmatprep.mubr.bf16.mxu0 0
        %1081 = vmatmul.mubr.bf16.gmra.mrb[0].mxu0 %v1040
        %v1082 = vpop.f32.mrb[0].mxu0
        %v1083 = vadd.f32 0.0, %v1082
        %v1084 = vpop.f32.mrb[0].mxu0
        %v1085 = vadd.f32 0.0, %v1084
        %v1086 = vpop.f32.mrb[0].mxu0
        %v1087 = vpop.f32.mrb[0].mxu0
        %1088 = vdwg.mxu0
        %v1089 = vmul.f32 %v1083, %v384
        %v1090 = vmul.f32 %v1085, %v388
        %v1091 = vadd.f32 %v1089, 0.0
        %v1092 = vadd.f32 %v1090, 0.0
        %s1093 = scalar_lea.vmem %s5, 4
        %v1094 = vld [vmem:[%s1093] sm:$0xf]
        %1097 = vrot.lane.b32.xlu0 %v1034, 127
        %v1098 = vpop.permute.xlu0 %1097
        %1099 = vrot.lane.b32.xlu0 %v1032, 127
        %v1100 = vpop.permute.xlu0 %1099
        %1101 = vrot.lane.b32.xlu0 %v1036, 127
        %v1102 = vpop.permute.xlu0 %1101
        %v1103 = vsel %vm405, %v1098, %v1100
        %v1104 = vsel %vm405, %v1100, %v1102
        %v1106 = vsel %vm1038, %v1094, 0
        %v1109 = vsel %vm1042, %v1103, 0
        %v1112 = vsel %vm1042, %v1104, 0
        %1114 = vmatprep.subr.bf16.mxu0 %v1112
        %1115 = vmatpush1.bf16.msra.mxu0 %v1109
        %1116 = vmatprep.subr.bf16.mxu0 0
        %1117 = vmatpush1.bf16.msra.mxu0 0
        %1118 = vmatprep.subr.bf16.mxu0 0
        %1119 = vmatpush1.bf16.msra.mxu0 0
        %1120 = vmatprep.subr.bf16.mxu0 0
        %1121 = vmatpush1.bf16.msra.mxu0 0
        %1122 = vmatprep.subr.bf16.mxu0 0
        %1123 = vmatpush1.bf16.msra.mxu0 0
        %1124 = vmatprep.subr.bf16.mxu0 0
        %1125 = vmatpush1.bf16.msra.mxu0 0
        %1126 = vmatprep.subr.bf16.mxu0 0
        %1127 = vmatpush1.bf16.msra.mxu0 0
        %1128 = vmatprep.subr.bf16.mxu0 0
        %1129 = vmatpush1.bf16.msra.mxu0 0
        %1130 = vmatprep.subr.bf16.mxu0 0
        %1131 = vmatpush1.bf16.msra.mxu0 0
        %1132 = vmatprep.subr.bf16.mxu0 0
        %1133 = vmatpush1.bf16.msra.mxu0 0
        %1134 = vmatprep.subr.bf16.mxu0 0
        %1135 = vmatpush1.bf16.msra.mxu0 0
        %1136 = vmatprep.subr.bf16.mxu0 0
        %1137 = vmatpush1.bf16.msra.mxu0 0
        %1138 = vmatprep.subr.bf16.mxu0 0
        %1139 = vmatpush1.bf16.msra.mxu0 0
        %1140 = vmatprep.subr.bf16.mxu0 0
        %1141 = vmatpush1.bf16.msra.mxu0 0
        %1142 = vmatprep.subr.bf16.mxu0 0
        %1143 = vmatpush1.bf16.msra.mxu0 0
        %1144 = vmatprep.subr.bf16.mxu0 0
        %1145 = vmatpush1.bf16.msra.mxu0 0
        %1146 = vmatprep.mubr.bf16.mxu0 0
        %1147 = vmatmul.mubr.bf16.gmra.mrb[0].mxu0 %v1106
        %v1148 = vpop.f32.mrb[0].mxu0
        %v1149 = vadd.f32 0.0, %v1148
        %v1150 = vpop.f32.mrb[0].mxu0
        %v1151 = vadd.f32 0.0, %v1150
        %v1152 = vpop.f32.mrb[0].mxu0
        %v1153 = vpop.f32.mrb[0].mxu0
        %1154 = vdwg.mxu0
        %v1155 = vmul.f32 %v1149, %v464
        %v1156 = vmul.f32 %v1151, %v468
        %v1157 = vadd.f32 %v1091, %v1155
        %v1158 = vadd.f32 %v1092, %v1156
        %s1159 = scalar_lea.vmem %s5, 8
        %v1160 = vld [vmem:[%s1159] sm:$0xf]
        %1161 = vrot.lane.b32.xlu0 %v1034, 126
        %v1162 = vpop.permute.xlu0 %1161
        %1163 = vrot.lane.b32.xlu0 %v1032, 126
        %v1164 = vpop.permute.xlu0 %1163
        %1165 = vrot.lane.b32.xlu0 %v1036, 126
        %v1166 = vpop.permute.xlu0 %1165
        %v1167 = vsel %vm483, %v1162, %v1164
        %v1168 = vsel %vm483, %v1164, %v1166
        %v1170 = vsel %vm1038, %v1160, 0
        %v1173 = vsel %vm1042, %v1167, 0
        %v1176 = vsel %vm1042, %v1168, 0
        %1178 = vmatprep.subr.bf16.mxu0 %v1176
        %1179 = vmatpush1.bf16.msra.mxu0 %v1173
        %1180 = vmatprep.subr.bf16.mxu0 0
        %1181 = vmatpush1.bf16.msra.mxu0 0
        %1182 = vmatprep.subr.bf16.mxu0 0
        %1183 = vmatpush1.bf16.msra.mxu0 0
        %1184 = vmatprep.subr.bf16.mxu0 0
        %1185 = vmatpush1.bf16.msra.mxu0 0
        %1186 = vmatprep.subr.bf16.mxu0 0
        %1187 = vmatpush1.bf16.msra.mxu0 0
        %1188 = vmatprep.subr.bf16.mxu0 0
        %1189 = vmatpush1.bf16.msra.mxu0 0
        %1190 = vmatprep.subr.bf16.mxu0 0
        %1191 = vmatpush1.bf16.msra.mxu0 0
        %1192 = vmatprep.subr.bf16.mxu0 0
        %1193 = vmatpush1.bf16.msra.mxu0 0
        %1194 = vmatprep.subr.bf16.mxu0 0
        %1195 = vmatpush1.bf16.msra.mxu0 0
        %1196 = vmatprep.subr.bf16.mxu0 0
        %1197 = vmatpush1.bf16.msra.mxu0 0
        %1198 = vmatprep.subr.bf16.mxu0 0
        %1199 = vmatpush1.bf16.msra.mxu0 0
        %1200 = vmatprep.subr.bf16.mxu0 0
        %1201 = vmatpush1.bf16.msra.mxu0 0
        %1202 = vmatprep.subr.bf16.mxu0 0
        %1203 = vmatpush1.bf16.msra.mxu0 0
        %1204 = vmatprep.subr.bf16.mxu0 0
        %1205 = vmatpush1.bf16.msra.mxu0 0
        %1206 = vmatprep.subr.bf16.mxu0 0
        %1207 = vmatpush1.bf16.msra.mxu0 0
        %1208 = vmatprep.subr.bf16.mxu0 0
        %1209 = vmatpush1.bf16.msra.mxu0 0
        %1210 = vmatprep.mubr.bf16.mxu0 0
        %1211 = vmatmul.mubr.bf16.gmra.mrb[0].mxu0 %v1170
        %v1212 = vpop.f32.mrb[0].mxu0
        %v1213 = vadd.f32 0.0, %v1212
        %v1214 = vpop.f32.mrb[0].mxu0
        %v1215 = vadd.f32 0.0, %v1214
        %v1216 = vpop.f32.mrb[0].mxu0
        %v1217 = vpop.f32.mrb[0].mxu0
        %1218 = vdwg.mxu0
        %v1219 = vmul.f32 %v1213, %v542
        %v1220 = vmul.f32 %v1215, %v546
        %v1221 = vadd.f32 %v1157, %v1219
        %v1222 = vadd.f32 %v1158, %v1220
        %s1223 = scalar_lea.vmem %s5, 12
        %v1224 = vld [vmem:[%s1223] sm:$0xf]
        %1225 = vrot.lane.b32.xlu0 %v1034, 112
        %v1226 = vpop.permute.xlu0 %1225
        %1227 = vrot.lane.b32.xlu0 %v1032, 112
        %v1228 = vpop.permute.xlu0 %1227
        %1229 = vrot.lane.b32.xlu0 %v1036, 112
        %v1230 = vpop.permute.xlu0 %1229
        %v1231 = vsel %vm561, %v1226, %v1228
        %v1232 = vsel %vm561, %v1228, %v1230
        %v1234 = vsel %vm1038, %v1224, 0
        %v1237 = vsel %vm1042, %v1231, 0
        %v1240 = vsel %vm1042, %v1232, 0
        %1242 = vmatprep.subr.bf16.mxu0 %v1240
        %1243 = vmatpush1.bf16.msra.mxu0 %v1237
        %1244 = vmatprep.subr.bf16.mxu0 0
        %1245 = vmatpush1.bf16.msra.mxu0 0
        %1246 = vmatprep.subr.bf16.mxu0 0
        %1247 = vmatpush1.bf16.msra.mxu0 0
        %1248 = vmatprep.subr.bf16.mxu0 0
        %1249 = vmatpush1.bf16.msra.mxu0 0
        %1250 = vmatprep.subr.bf16.mxu0 0
        %1251 = vmatpush1.bf16.msra.mxu0 0
        %1252 = vmatprep.subr.bf16.mxu0 0
        %1253 = vmatpush1.bf16.msra.mxu0 0
        %1254 = vmatprep.subr.bf16.mxu0 0
        %1255 = vmatpush1.bf16.msra.mxu0 0
        %1256 = vmatprep.subr.bf16.mxu0 0
        %1257 = vmatpush1.bf16.msra.mxu0 0
        %1258 = vmatprep.subr.bf16.mxu0 0
        %1259 = vmatpush1.bf16.msra.mxu0 0
        %1260 = vmatprep.subr.bf16.mxu0 0
        %1261 = vmatpush1.bf16.msra.mxu0 0
        %1262 = vmatprep.subr.bf16.mxu0 0
        %1263 = vmatpush1.bf16.msra.mxu0 0
        %1264 = vmatprep.subr.bf16.mxu0 0
        %1265 = vmatpush1.bf16.msra.mxu0 0
        %1266 = vmatprep.subr.bf16.mxu0 0
        %1267 = vmatpush1.bf16.msra.mxu0 0
        %1268 = vmatprep.subr.bf16.mxu0 0
        %1269 = vmatpush1.bf16.msra.mxu0 0
        %1270 = vmatprep.subr.bf16.mxu0 0
        %1271 = vmatpush1.bf16.msra.mxu0 0
        %1272 = vmatprep.subr.bf16.mxu0 0
        %1273 = vmatpush1.bf16.msra.mxu0 0
        %1274 = vmatprep.mubr.bf16.mxu0 0
        %1275 = vmatmul.mubr.bf16.gmra.mrb[0].mxu0 %v1234
        %v1276 = vpop.f32.mrb[0].mxu0
        %v1277 = vadd.f32 0.0, %v1276
        %v1278 = vpop.f32.mrb[0].mxu0
        %v1279 = vadd.f32 0.0, %v1278
        %v1280 = vpop.f32.mrb[0].mxu0
        %v1281 = vpop.f32.mrb[0].mxu0
        %1282 = vdwg.mxu0
        %v1283 = vmul.f32 %v1277, %v620
        %v1284 = vmul.f32 %v1279, %v624
        %v1285 = vadd.f32 %v1221, %v1283
        %v1286 = vadd.f32 %v1222, %v1284
        %s1287 = scalar_lea.vmem %s5, 16
        %v1288 = vld [vmem:[%s1287] sm:$0xf]
        %1289 = vrot.lane.b32.xlu0 %v1034, 111
        %v1290 = vpop.permute.xlu0 %1289
        %1291 = vrot.lane.b32.xlu0 %v1032, 111
        %v1292 = vpop.permute.xlu0 %1291
        %1293 = vrot.lane.b32.xlu0 %v1036, 111
        %v1294 = vpop.permute.xlu0 %1293
        %v1295 = vsel %vm639, %v1290, %v1292
        %v1296 = vsel %vm639, %v1292, %v1294
        %v1298 = vsel %vm1038, %v1288, 0
        %v1301 = vsel %vm1042, %v1295, 0
        %v1304 = vsel %vm1042, %v1296, 0
        %1306 = vmatprep.subr.bf16.mxu0 %v1304
        %1307 = vmatpush1.bf16.msra.mxu0 %v1301
        %1308 = vmatprep.subr.bf16.mxu0 0
        %1309 = vmatpush1.bf16.msra.mxu0 0
        %1310 = vmatprep.subr.bf16.mxu0 0
        %1311 = vmatpush1.bf16.msra.mxu0 0
        %1312 = vmatprep.subr.bf16.mxu0 0
        %1313 = vmatpush1.bf16.msra.mxu0 0
        %1314 = vmatprep.subr.bf16.mxu0 0
        %1315 = vmatpush1.bf16.msra.mxu0 0
        %1316 = vmatprep.subr.bf16.mxu0 0
        %1317 = vmatpush1.bf16.msra.mxu0 0
        %1318 = vmatprep.subr.bf16.mxu0 0
        %1319 = vmatpush1.bf16.msra.mxu0 0
        %1320 = vmatprep.subr.bf16.mxu0 0
        %1321 = vmatpush1.bf16.msra.mxu0 0
        %1322 = vmatprep.subr.bf16.mxu0 0
        %1323 = vmatpush1.bf16.msra.mxu0 0
        %1324 = vmatprep.subr.bf16.mxu0 0
        %1325 = vmatpush1.bf16.msra.mxu0 0
        %1326 = vmatprep.subr.bf16.mxu0 0
        %1327 = vmatpush1.bf16.msra.mxu0 0
        %1328 = vmatprep.subr.bf16.mxu0 0
        %1329 = vmatpush1.bf16.msra.mxu0 0
        %1330 = vmatprep.subr.bf16.mxu0 0
        %1331 = vmatpush1.bf16.msra.mxu0 0
        %1332 = vmatprep.subr.bf16.mxu0 0
        %1333 = vmatpush1.bf16.msra.mxu0 0
        %1334 = vmatprep.subr.bf16.mxu0 0
        %1335 = vmatpush1.bf16.msra.mxu0 0
        %1336 = vmatprep.subr.bf16.mxu0 0
        %1337 = vmatpush1.bf16.msra.mxu0 0
        %1338 = vmatprep.mubr.bf16.mxu0 0
        %1339 = vmatmul.mubr.bf16.gmra.mrb[0].mxu0 %v1298
        %v1340 = vpop.f32.mrb[0].mxu0
        %v1341 = vadd.f32 0.0, %v1340
        %v1342 = vpop.f32.mrb[0].mxu0
        %v1343 = vadd.f32 0.0, %v1342
        %v1344 = vpop.f32.mrb[0].mxu0
        %v1345 = vpop.f32.mrb[0].mxu0
        %1346 = vdwg.mxu0
        %v1347 = vadd.f32 %v1285, %v1341
        %v1348 = vadd.f32 %v1286, %v1343
        %s1349 = scalar_lea.vmem %s5, 20
        %v1350 = vld [vmem:[%s1349] sm:$0xf]
        %1351 = vrot.lane.b32.xlu0 %v1034, 110
        %v1352 = vpop.permute.xlu0 %1351
        %1353 = vrot.lane.b32.xlu0 %v1032, 110
        %v1354 = vpop.permute.xlu0 %1353
        %1355 = vrot.lane.b32.xlu0 %v1036, 110
        %v1356 = vpop.permute.xlu0 %1355
        %v1357 = vsel %vm702, %v1352, %v1354
        %v1358 = vsel %vm702, %v1354, %v1356
        %v1360 = vsel %vm1038, %v1350, 0
        %v1363 = vsel %vm1042, %v1357, 0
        %v1366 = vsel %vm1042, %v1358, 0
        %1368 = vmatprep.subr.bf16.mxu0 %v1366
        %1369 = vmatpush1.bf16.msra.mxu0 %v1363
        %1370 = vmatprep.subr.bf16.mxu0 0
        %1371 = vmatpush1.bf16.msra.mxu0 0
        %1372 = vmatprep.subr.bf16.mxu0 0
        %1373 = vmatpush1.bf16.msra.mxu0 0
        %1374 = vmatprep.subr.bf16.mxu0 0
        %1375 = vmatpush1.bf16.msra.mxu0 0
        %1376 = vmatprep.subr.bf16.mxu0 0
        %1377 = vmatpush1.bf16.msra.mxu0 0
        %1378 = vmatprep.subr.bf16.mxu0 0
        %1379 = vmatpush1.bf16.msra.mxu0 0
        %1380 = vmatprep.subr.bf16.mxu0 0
        %1381 = vmatpush1.bf16.msra.mxu0 0
        %1382 = vmatprep.subr.bf16.mxu0 0
        %1383 = vmatpush1.bf16.msra.mxu0 0
        %1384 = vmatprep.subr.bf16.mxu0 0
        %1385 = vmatpush1.bf16.msra.mxu0 0
        %1386 = vmatprep.subr.bf16.mxu0 0
        %1387 = vmatpush1.bf16.msra.mxu0 0
        %1388 = vmatprep.subr.bf16.mxu0 0
        %1389 = vmatpush1.bf16.msra.mxu0 0
        %1390 = vmatprep.subr.bf16.mxu0 0
        %1391 = vmatpush1.bf16.msra.mxu0 0
        %1392 = vmatprep.subr.bf16.mxu0 0
        %1393 = vmatpush1.bf16.msra.mxu0 0
        %1394 = vmatprep.subr.bf16.mxu0 0
        %1395 = vmatpush1.bf16.msra.mxu0 0
        %1396 = vmatprep.subr.bf16.mxu0 0
        %1397 = vmatpush1.bf16.msra.mxu0 0
        %1398 = vmatprep.subr.bf16.mxu0 0
        %1399 = vmatpush1.bf16.msra.mxu0 0
        %1400 = vmatprep.mubr.bf16.mxu0 0
        %1401 = vmatmul.mubr.bf16.gmra.mrb[0].mxu0 %v1360
        %v1402 = vpop.f32.mrb[0].mxu0
        %v1403 = vadd.f32 0.0, %v1402
        %v1404 = vpop.f32.mrb[0].mxu0
        %v1405 = vadd.f32 0.0, %v1404
        %v1406 = vpop.f32.mrb[0].mxu0
        %v1407 = vpop.f32.mrb[0].mxu0
        %1408 = vdwg.mxu0
        %v1409 = vmul.f32 %v1403, %v761
        %v1410 = vmul.f32 %v1405, %v765
        %v1411 = vadd.f32 %v1347, %v1409
        %v1412 = vadd.f32 %v1348, %v1410
        %s1413 = scalar_lea.vmem %s5, 24
        %v1414 = vld [vmem:[%s1413] sm:$0xf]
        %1415 = vrot.lane.b32.xlu0 %v1034, 96
        %v1416 = vpop.permute.xlu0 %1415
        %1417 = vrot.lane.b32.xlu0 %v1032, 96
        %v1418 = vpop.permute.xlu0 %1417
        %1419 = vrot.lane.b32.xlu0 %v1036, 96
        %v1420 = vpop.permute.xlu0 %1419
        %v1421 = vsel %vm780, %v1416, %v1418
        %v1422 = vsel %vm780, %v1418, %v1420
        %v1424 = vsel %vm1038, %v1414, 0
        %v1427 = vsel %vm1042, %v1421, 0
        %v1430 = vsel %vm1042, %v1422, 0
        %1432 = vmatprep.subr.bf16.mxu0 %v1430
        %1433 = vmatpush1.bf16.msra.mxu0 %v1427
        %1434 = vmatprep.subr.bf16.mxu0 0
        %1435 = vmatpush1.bf16.msra.mxu0 0
        %1436 = vmatprep.subr.bf16.mxu0 0
        %1437 = vmatpush1.bf16.msra.mxu0 0
        %1438 = vmatprep.subr.bf16.mxu0 0
        %1439 = vmatpush1.bf16.msra.mxu0 0
        %1440 = vmatprep.subr.bf16.mxu0 0
        %1441 = vmatpush1.bf16.msra.mxu0 0
        %1442 = vmatprep.subr.bf16.mxu0 0
        %1443 = vmatpush1.bf16.msra.mxu0 0
        %1444 = vmatprep.subr.bf16.mxu0 0
        %1445 = vmatpush1.bf16.msra.mxu0 0
        %1446 = vmatprep.subr.bf16.mxu0 0
        %1447 = vmatpush1.bf16.msra.mxu0 0
        %1448 = vmatprep.subr.bf16.mxu0 0
        %1449 = vmatpush1.bf16.msra.mxu0 0
        %1450 = vmatprep.subr.bf16.mxu0 0
        %1451 = vmatpush1.bf16.msra.mxu0 0
        %1452 = vmatprep.subr.bf16.mxu0 0
        %1453 = vmatpush1.bf16.msra.mxu0 0
        %1454 = vmatprep.subr.bf16.mxu0 0
        %1455 = vmatpush1.bf16.msra.mxu0 0
        %1456 = vmatprep.subr.bf16.mxu0 0
        %1457 = vmatpush1.bf16.msra.mxu0 0
        %1458 = vmatprep.subr.bf16.mxu0 0
        %1459 = vmatpush1.bf16.msra.mxu0 0
        %1460 = vmatprep.subr.bf16.mxu0 0
        %1461 = vmatpush1.bf16.msra.mxu0 0
        %1462 = vmatprep.subr.bf16.mxu0 0
        %1463 = vmatpush1.bf16.msra.mxu0 0
        %1464 = vmatprep.mubr.bf16.mxu0 0
        %1465 = vmatmul.mubr.bf16.gmra.mrb[0].mxu0 %v1424
        %v1466 = vpop.f32.mrb[0].mxu0
        %v1467 = vadd.f32 0.0, %v1466
        %v1468 = vpop.f32.mrb[0].mxu0
        %v1469 = vadd.f32 0.0, %v1468
        %v1470 = vpop.f32.mrb[0].mxu0
        %v1471 = vpop.f32.mrb[0].mxu0
        %1472 = vdwg.mxu0
        %v1473 = vmul.f32 %v1467, %v839
        %v1474 = vmul.f32 %v1469, %v843
        %v1475 = vadd.f32 %v1411, %v1473
        %v1476 = vadd.f32 %v1412, %v1474
        %s1477 = scalar_lea.vmem %s5, 28
        %v1478 = vld [vmem:[%s1477] sm:$0xf]
        %1479 = vrot.lane.b32.xlu0 %v1034, 95
        %v1480 = vpop.permute.xlu0 %1479
        %1481 = vrot.lane.b32.xlu0 %v1032, 95
        %v1482 = vpop.permute.xlu0 %1481
        %1483 = vrot.lane.b32.xlu0 %v1036, 95
        %v1484 = vpop.permute.xlu0 %1483
        %v1485 = vsel %vm858, %v1480, %v1482
        %v1486 = vsel %vm858, %v1482, %v1484
        %v1488 = vsel %vm1038, %v1478, 0
        %v1491 = vsel %vm1042, %v1485, 0
        %v1494 = vsel %vm1042, %v1486, 0
        %1496 = vmatprep.subr.bf16.mxu0 %v1494
        %1497 = vmatpush1.bf16.msra.mxu0 %v1491
        %1498 = vmatprep.subr.bf16.mxu0 0
        %1499 = vmatpush1.bf16.msra.mxu0 0
        %1500 = vmatprep.subr.bf16.mxu0 0
        %1501 = vmatpush1.bf16.msra.mxu0 0
        %1502 = vmatprep.subr.bf16.mxu0 0
        %1503 = vmatpush1.bf16.msra.mxu0 0
        %1504 = vmatprep.subr.bf16.mxu0 0
        %1505 = vmatpush1.bf16.msra.mxu0 0
        %1506 = vmatprep.subr.bf16.mxu0 0
        %1507 = vmatpush1.bf16.msra.mxu0 0
        %1508 = vmatprep.subr.bf16.mxu0 0
        %1509 = vmatpush1.bf16.msra.mxu0 0
        %1510 = vmatprep.subr.bf16.mxu0 0
        %1511 = vmatpush1.bf16.msra.mxu0 0
        %1512 = vmatprep.subr.bf16.mxu0 0
        %1513 = vmatpush1.bf16.msra.mxu0 0
        %1514 = vmatprep.subr.bf16.mxu0 0
        %1515 = vmatpush1.bf16.msra.mxu0 0
        %1516 = vmatprep.subr.bf16.mxu0 0
        %1517 = vmatpush1.bf16.msra.mxu0 0
        %1518 = vmatprep.subr.bf16.mxu0 0
        %1519 = vmatpush1.bf16.msra.mxu0 0
        %1520 = vmatprep.subr.bf16.mxu0 0
        %1521 = vmatpush1.bf16.msra.mxu0 0
        %1522 = vmatprep.subr.bf16.mxu0 0
        %1523 = vmatpush1.bf16.msra.mxu0 0
        %1524 = vmatprep.subr.bf16.mxu0 0
        %1525 = vmatpush1.bf16.msra.mxu0 0
        %1526 = vmatprep.subr.bf16.mxu0 0
        %1527 = vmatpush1.bf16.msra.mxu0 0
        %1528 = vmatprep.mubr.bf16.mxu0 0
        %1529 = vmatmul.mubr.bf16.gmra.mrb[0].mxu0 %v1488
        %v1530 = vpop.f32.mrb[0].mxu0
        %v1531 = vadd.f32 0.0, %v1530
        %v1532 = vpop.f32.mrb[0].mxu0
        %v1533 = vadd.f32 0.0, %v1532
        %v1534 = vpop.f32.mrb[0].mxu0
        %v1535 = vpop.f32.mrb[0].mxu0
        %1536 = vdwg.mxu0
        %v1537 = vmul.f32 %v1531, %v917
        %v1538 = vmul.f32 %v1533, %v921
        %v1539 = vadd.f32 %v1475, %v1537
        %v1540 = vadd.f32 %v1476, %v1538
        %s1541 = scalar_lea.vmem %s5, 32
        %v1542 = vld [vmem:[%s1541] sm:$0xf]
        %1543 = vrot.lane.b32.xlu0 %v1034, 94
        %v1544 = vpop.permute.xlu0 %1543
        %1545 = vrot.lane.b32.xlu0 %v1032, 94
        %v1546 = vpop.permute.xlu0 %1545
        %1547 = vrot.lane.b32.xlu0 %v1036, 94
        %v1548 = vpop.permute.xlu0 %1547
        %v1549 = vsel %vm936, %v1544, %v1546
        %v1550 = vsel %vm936, %v1546, %v1548
        %v1552 = vsel %vm1038, %v1542, 0
        %v1555 = vsel %vm1042, %v1549, 0
        %v1558 = vsel %vm1042, %v1550, 0
        %1560 = vmatprep.subr.bf16.mxu0 %v1558
        %1561 = vmatpush1.bf16.msra.mxu0 %v1555
        %1562 = vmatprep.subr.bf16.mxu0 0
        %1563 = vmatpush1.bf16.msra.mxu0 0
        %1564 = vmatprep.subr.bf16.mxu0 0
        %1565 = vmatpush1.bf16.msra.mxu0 0
        %1566 = vmatprep.subr.bf16.mxu0 0
        %1567 = vmatpush1.bf16.msra.mxu0 0
        %1568 = vmatprep.subr.bf16.mxu0 0
        %1569 = vmatpush1.bf16.msra.mxu0 0
        %1570 = vmatprep.subr.bf16.mxu0 0
        %1571 = vmatpush1.bf16.msra.mxu0 0
        %1572 = vmatprep.subr.bf16.mxu0 0
        %1573 = vmatpush1.bf16.msra.mxu0 0
        %1574 = vmatprep.subr.bf16.mxu0 0
        %1575 = vmatpush1.bf16.msra.mxu0 0
        %1576 = vmatprep.subr.bf16.mxu0 0
        %1577 = vmatpush1.bf16.msra.mxu0 0
        %1578 = vmatprep.subr.bf16.mxu0 0
        %1579 = vmatpush1.bf16.msra.mxu0 0
        %1580 = vmatprep.subr.bf16.mxu0 0
        %1581 = vmatpush1.bf16.msra.mxu0 0
        %1582 = vmatprep.subr.bf16.mxu0 0
        %1583 = vmatpush1.bf16.msra.mxu0 0
        %1584 = vmatprep.subr.bf16.mxu0 0
        %1585 = vmatpush1.bf16.msra.mxu0 0
        %1586 = vmatprep.subr.bf16.mxu0 0
        %1587 = vmatpush1.bf16.msra.mxu0 0
        %1588 = vmatprep.subr.bf16.mxu0 0
        %1589 = vmatpush1.bf16.msra.mxu0 0
        %1590 = vmatprep.subr.bf16.mxu0 0
        %1591 = vmatpush1.bf16.msra.mxu0 0
        %1592 = vmatprep.mubr.bf16.mxu0 0
        %1593 = vmatmul.mubr.bf16.gmra.mrb[0].mxu0 %v1552
        %v1594 = vpop.f32.mrb[0].mxu0
        %v1595 = vadd.f32 0.0, %v1594
        %v1596 = vpop.f32.mrb[0].mxu0
        %v1597 = vadd.f32 0.0, %v1596
        %v1598 = vpop.f32.mrb[0].mxu0
        %v1599 = vpop.f32.mrb[0].mxu0
        %1600 = vdwg.mxu0
        %v1601 = vmul.f32 %v1595, %v995
        %v1602 = vmul.f32 %v1597, %v999
        %v1603 = vadd.f32 %v1539, %v1601
        %v1604 = vadd.f32 %v1540, %v1602
        %v1605 = vld [vmem:[%s6] sm:$0xff]
        %1607 = vset.pattern.permute.xlu0 0
        %1608 = vperm.xlu0 %1607, %v1605
        %v1609 = vpop.permute.xlu0 %1608
        %v1611 = vmul.f32 %v1603, %v1609
        %v1612 = vmul.f32 %v1604, %v1609
        %v1613 = vld [vmem:[%s7] sm:$0xff]
        %1615 = vset.pattern.permute.xlu0 0
        %1616 = vperm.xlu0 %1615, %v1613
        %v1617 = vpop.permute.xlu0 %1616
        %v1619 = vadd.f32 %v1611, %v1617
        %v1620 = vadd.f32 %v1612, %v1617
        %v1621 = vmax.f32 %v1619, 0.0
        %v1622 = vmax.f32 %v1620, 0.0
        %1623 = vst [vmem:[%s298] sm:$0xff] %v1621
        %1624 = vst [vmem:[%s298 + $0x8] sm:$0xff] %v1622
        %s1625 = sand.u32 %s203, 1
        %s1626 = scalar_lea.sflag [#allocation3], %s1625
        %s1627 = sand.u32 %s203, 1
        %s1628 = smul.addr %s1627, 16
        %s1629 = scalar_lea.vmem [#allocation2], %s1628
        // Predicated region
        $region53: #{tpu_custom_call.1} parent=51 // pred_check
          %p1630 = pneg %p213
        $region54: #{tpu_custom_call.1} parent=51 // pred_check_branch
          %1632 = sbr.rel (%p1630) target = $region56
        $region55: #{tpu_custom_call.1} parent=51 // pred_region
          %s1634 = ssub.s32 256, 256
          %1635 = vsyncadd %s1626, %s1634
          %s1636 = smul.addr %s22, 2
          %s1637 = smul.addr %s1636, 128
          %s1638 = scalar_lea.hbm %s8, %s1637
          %s1640 = sshll.u32 %s1629, 4
          %s1641 = int_to_ptr.vmem [resolvable:$true] %s1640
          %1643 = dma.vmem_to_hbm [thread:$0]  %s1641, 256, %s1638, %s1626
        $region56: #{tpu_custom_call.1} parent=51 // pred_fallthru
          _
      $region52: #{tpu_custom_call.1} parent=5 // pred_fallthru
        _
      %p1644 = scmp.le.s32.totalorder 2, %s17
      // Predicated region
      $region57: #{tpu_custom_call.1} parent=5 // pred_check
        %p1645 = pneg %p1644
      $region58: #{tpu_custom_call.1} parent=5 // pred_check_branch
        %1647 = sbr.rel (%p1645) target = $region60
      $region59: #{tpu_custom_call.1} parent=5 // pred_region
        %s1648 = ssub.s32 %s17, 2
        // Predicated region
        $region61: #{tpu_custom_call.1} parent=59 // pred_check
          %p1649 = pneg %p219
        $region62: #{tpu_custom_call.1} parent=59 // pred_check_branch
          %1651 = sbr.rel (%p1649) target = $region64
        $region63: #{tpu_custom_call.1} parent=59 // pred_region
          %s1652 = sand.u32 %s204, 1
          %s1653 = scalar_lea.sflag [#allocation3], %s1652
          %s1654 = sand.u32 %s204, 1
          %s1655 = smul.addr %s1654, 16
          %s1656 = scalar_lea.vmem [#allocation2], %s1655
          %1657 = dma.done %s1653, 256
        $region64: #{tpu_custom_call.1} parent=59 // pred_fallthru
          _
      $region60: #{tpu_custom_call.1} parent=5 // pred_fallthru
        _
    $region6: #{tpu_custom_call.1} parent=1 // loop_footer
      %s21 = sadd.s32 1, %s17
    $region7: #{tpu_custom_call.1} parent=1 // loop_footer_branch
      %16 = sbr.rel target = $region3
    $region8: #{tpu_custom_call.1} parent=1 // loop_exit
      _
    %1658 = vsyncpa [#allocation3], 1
    %s1659 = scalar_lea.sflag [#allocation3], 1
    %1660 = vsyncpa %s1659, 1

</llo_original>
